<compile_context>
chip_gen: v6e
topology: v6e:2x2x1
jax: 0.10.0
libtpu: 0.0.40
codegen_flags: <defaults>
</compile_context>

<pallas_src>
import functools

import jax
import jax.numpy as jnp
from jax import lax
from jax.experimental import pallas as pl
from jax.experimental.pallas import tpu as pltpu

RELU6_MAX = 6.0
EPS = 1e-5


def _fold_bn(gamma, beta, mean, var, eps=EPS):
    scale = gamma / jnp.sqrt(var + eps)
    bias = beta - mean * scale
    return scale.astype(jnp.float32), bias.astype(jnp.float32)


# ---------------------------------------------------------------------------
# Fused kernel: 1x1 expand + BN + ReLU6  ->  3x3 DW (stride) + BN + ReLU6
#               ->  1x1 project + BN (+ residual), all per batch element.
# ---------------------------------------------------------------------------
def fused_ir_kernel(x_ref, w1_ref, s1_ref, b1_ref, k_ref, s2_ref, b2_ref,
                    w3_ref, s3_ref, b3_ref, o_ref, hbuf, *, stride, use_res):
    H, W, Cin = x_ref.shape          # input block (batch squeezed)
    Ho, Wo, oup = o_ref.shape        # output block (batch squeezed)
    hid = hbuf.shape[-1]
    cdt = w1_ref.dtype               # compute (MXU) dtype: f32 or bf16

    # ---- zero the halo border of the padded hid-channel scratch ----------
    zrow = jnp.zeros((1, W + 2, hid), jnp.float32)
    zcol = jnp.zeros((H + 2, 1, hid), jnp.float32)
    hbuf[0:1, :, :] = zrow
    hbuf[H + 1:H + 2, :, :] = zrow
    hbuf[:, 0:1, :] = zcol
    hbuf[:, W + 1:W + 2, :] = zcol

    # ---- stage 1: 1x1 expand (MXU) + BN + ReLU6, result stays in VMEM ----
    x = x_ref[...]                                   # (H, W, Cin), cdt
    x2d = x.reshape(H * W, Cin)
    y = jnp.dot(x2d, w1_ref[...], preferred_element_type=jnp.float32)
    y = y * s1_ref[...] + b1_ref[...]                # f32 epilogue
    y = jnp.clip(y, 0.0, RELU6_MAX)
    hbuf[1:H + 1, 1:W + 1, :] = y.reshape(H, W, hid)

    # ---- stage 2: 3x3 depthwise, stride folded into strided slices -------
    k = k_ref[...].astype(jnp.float32)               # (9, hid)
    acc = jnp.zeros((Ho, Wo, hid), jnp.float32)
    for dh in range(3):
        if stride == 1:
            rsl = pl.ds(dh, Ho)
        else:
            rsl = pl.ds(dh, Ho, stride=stride)
        for dw in range(3):
            if stride == 1:
                csl = pl.ds(dw, Wo)
            else:
                csl = pl.ds(dw, Wo, stride=stride)
            tap = hbuf[rsl, csl, :]                  # (Ho, Wo, hid) f32
            acc = acc + tap * k[3 * dh + dw:3 * dh + dw + 1, :]
    h = jnp.clip(acc * s2_ref[...] + b2_ref[...], 0.0, RELU6_MAX)

    # ---- stage 3: 1x1 project (MXU) + BN (+ residual) ---------------------
    h2d = h.reshape(Ho * Wo, hid).astype(cdt)
    z = jnp.dot(h2d, w3_ref[...], preferred_element_type=jnp.float32)
    z = z * s3_ref[...] + b3_ref[...]
    if use_res:
        z = z + x2d.astype(jnp.float32)
    o_ref[...] = z.reshape(Ho, Wo, oup).astype(o_ref.dtype)


# ---------------------------------------------------------------------------
# NHWC entry point (channels-last == lane-dense). Grid over batch only; the
# whole expanded activation for one image stays resident in VMEM.
# ---------------------------------------------------------------------------
def inverted_residual_forward_nhwc(params, x_nhwc, stride, use_res_connect,
                                   *, compute_dtype=jnp.float32):
    assert stride in (1, 2)
    N, H, W, Cin = x_nhwc.shape
    hid = params["w1"].shape[1]
    oup = params["w3"].shape[1]
    Ho = (H - 1) // stride + 1
    Wo = (W - 1) // stride + 1

    cdt = compute_dtype
    x = x_nhwc.astype(cdt)
    w1 = params["w1"].astype(cdt)
    w3 = params["w3"].astype(cdt)
    k9 = params["k9"].astype(jnp.float32)
    s1 = params["s1"].reshape(1, hid).astype(jnp.float32)
    b1 = params["b1"].reshape(1, hid).astype(jnp.float32)
    s2 = params["s2"].reshape(1, hid).astype(jnp.float32)
    b2 = params["b2"].reshape(1, hid).astype(jnp.float32)
    s3 = params["s3"].reshape(1, oup).astype(jnp.float32)
    b3 = params["b3"].reshape(1, oup).astype(jnp.float32)

    kernel = functools.partial(fused_ir_kernel, stride=stride,
                               use_res=use_res_connect)

    # VMEM budget estimate (scratch + double-buffered in/out blocks + weights),
    # sized conservatively against v7x's 64 MiB physical / 32 MiB scoped VMEM.
    itm = jnp.dtype(cdt).itemsize
    vmem_est = ((H + 2) * (W + 2) * hid * 4          # padded hid scratch (f32)
                + 2 * H * W * Cin * itm              # input block, 2 buffers
                + 2 * Ho * Wo * oup * 4              # output block, 2 buffers
                + 4 * Ho * Wo * hid                  # DW accumulator value
                + 2 * (Cin * hid + hid * oup) * itm  # weights
                + 2 * (4 * hid + 2 * oup + 9 * hid) * 4)
    vmem_limit = int(min(max(2 * vmem_est, 16 * 1024 * 1024), 32 * 1024 * 1024))

    return pl.pallas_call(
        kernel,
        out_shape=jax.ShapeDtypeStruct((N, Ho, Wo, oup), jnp.float32),
        grid=(N,),
        in_specs=[
            pl.BlockSpec((None, H, W, Cin), lambda n: (n, 0, 0, 0)),
            pl.BlockSpec((Cin, hid), lambda n: (0, 0)),
            pl.BlockSpec((1, hid), lambda n: (0, 0)),
            pl.BlockSpec((1, hid), lambda n: (0, 0)),
            pl.BlockSpec((9, hid), lambda n: (0, 0)),
            pl.BlockSpec((1, hid), lambda n: (0, 0)),
            pl.BlockSpec((1, hid), lambda n: (0, 0)),
            pl.BlockSpec((hid, oup), lambda n: (0, 0)),
            pl.BlockSpec((1, oup), lambda n: (0, 0)),
            pl.BlockSpec((1, oup), lambda n: (0, 0)),
        ],
        out_specs=pl.BlockSpec((None, Ho, Wo, oup), lambda n: (n, 0, 0, 0)),
        scratch_shapes=[pltpu.VMEM((H + 2, W + 2, hid), jnp.float32)],
        compiler_params=pltpu.CompilerParams(
            dimension_semantics=("parallel",),
            vmem_limit_bytes=vmem_limit,
        ),
    )(x, w1, s1, b1, k9, s2, b2, w3, s3, b3)


# ---------------------------------------------------------------------------
# NCHW wrapper (matches the PyTorch module interface).
# ---------------------------------------------------------------------------
def inverted_residual_forward(params, x_nchw, stride, use_res_connect,
                              *, compute_dtype=jnp.float32):
    # NOTE: if the surrounding model keeps NHWC these two transposes vanish;
    # they only exist to mirror the PyTorch NCHW interface.
    x = jnp.transpose(x_nchw, (0, 2, 3, 1))
    out = inverted_residual_forward_nhwc(params, x, stride, use_res_connect,
                                         compute_dtype=compute_dtype)
    return jnp.transpose(out, (0, 3, 1, 2))


# ---------------------------------------------------------------------------
# Deterministic parameter init (same layer shapes as the PyTorch module).
# ---------------------------------------------------------------------------
def init_params(key, inp, oup, expand_ratio):
    hid = int(round(inp * expand_ratio))
    ks = jax.random.split(key, 6)

    def bn(k, c):
        k1, k2, k3, k4 = jax.random.split(k, 4)
        gamma = jax.random.uniform(k1, (c,), minval=0.5, maxval=1.5)
        beta = 0.1 * jax.random.normal(k2, (c,))
        mean = 0.1 * jax.random.normal(k3, (c,))
        var = jax.random.uniform(k4, (c,), minval=0.5, maxval=1.5)
        return _fold_bn(gamma, beta, mean, var)

    w1 = (0.3 * jax.random.normal(ks[0], (inp, hid))).astype(jnp.float32)
    k33 = (0.3 * jax.random.normal(ks[1], (3, 3, hid))).astype(jnp.float32)
    w3 = (0.3 * jax.random.normal(ks[2], (hid, oup))).astype(jnp.float32)
    s1, b1 = bn(ks[3], hid)
    s2, b2 = bn(ks[4], hid)
    s3, b3 = bn(ks[5], oup)
    return dict(w1=w1, k33=k33, k9=k33.reshape(9, hid), w3=w3,
                s1=s1, b1=b1, s2=s2, b2=b2, s3=s3, b3=b3)


# ---------------------------------------------------------------------------
# Pure-JAX reference.  `compute_dtype` mirrors the kernel's quantisation points
# (x / w1 / w3 and the pre-projection activation) so the bf16 fast path can be
# checked tightly; with f32 it is exactly the original eval-mode forward.
# ---------------------------------------------------------------------------
def reference(params, x_nchw, stride, use_res_connect,
              compute_dtype=jnp.float32):
    f32 = jnp.float32
    x = jnp.transpose(x_nchw, (0, 2, 3, 1)).astype(compute_dtype).astype(f32)
    hid = params["w1"].shape[1]
    w1 = params["w1"].astype(compute_dtype).astype(f32)
    w3 = params["w3"].astype(compute_dtype).astype(f32)

    h = jnp.einsum("nhwc,cd->nhwd", x, w1)
    h = jnp.clip(h * params["s1"] + params["b1"], 0.0, RELU6_MAX)
    kern = params["k33"].reshape(3, 3, 1, hid)
    h = lax.conv_general_dilated(
        h, kern, window_strides=(stride, stride), padding=((1, 1), (1, 1)),
        dimension_numbers=("NHWC", "HWIO", "NHWC"), feature_group_count=hid)
    h = jnp.clip(h * params["s2"] + params["b2"], 0.0, RELU6_MAX)
    h = h.astype(compute_dtype).astype(f32)
    y = jnp.einsum("nhwd,do->nhwo", h, w3)
    y = y * params["s3"] + params["b3"]
    if use_res_connect:
        y = y + x
    return jnp.transpose(y, (0, 3, 1, 2))


if __name__ == "__main__":
    key = jax.random.PRNGKey(0)
    N, H, W = 2, 16, 16
    configs = [
        dict(inp=8, oup=8, stride=1, expand_ratio=4),   # residual path
        dict(inp=8, oup=16, stride=2, expand_ratio=4),  # non-residual, strided
    ]

    fwd = jax.jit(inverted_residual_forward,
                  static_argnames=("stride", "use_res_connect", "compute_dtype"))

    for cfg in configs:
        key, k_x, k_p = jax.random.split(key, 3)
        params = init_params(k_p, cfg["inp"], cfg["oup"], cfg["expand_ratio"])
        x = jax.random.normal(k_x, (N, cfg["inp"], H, W), dtype=jnp.float32)
        use_res = (cfg["stride"] == 1 and cfg["inp"] == cfg["oup"])

        # ---- f32 path: exact eval-mode semantics -------------------------
        out = jax.block_until_ready(
            fwd(params, x, stride=cfg["stride"], use_res_connect=use_res,
                compute_dtype=jnp.float32))
        ref = reference(params, x, cfg["stride"], use_res, jnp.float32)
        assert out.shape == ref.shape, (out.shape, ref.shape)
        err = float(jnp.max(jnp.abs(out - ref)))
        assert err < 2e-4, f"f32 mismatch for {cfg}: max abs err {err}"

        # ---- bf16 fast path (half HBM traffic, native MXU dtype) ---------
        out_bf = jax.block_until_ready(
            fwd(params, x, stride=cfg["stride"], use_res_connect=use_res,
                compute_dtype=jnp.bfloat16))
        ref_bf = reference(params, x, cfg["stride"], use_res, jnp.bfloat16)
        assert out_bf.shape == ref_bf.shape
        err_bf = float(jnp.max(jnp.abs(out_bf - ref_bf)))
        assert err_bf < 1e-2, f"bf16 mismatch for {cfg}: max abs err {err_bf}"

    print("KERNEL_OK")
</pallas_src>

<mosaic_0001>
module attributes {stable_mosaic.version = 11 : i64} {
  func.func @fused_ir_kernel(%arg0: i32, %arg1: memref<1x16x16x8xf32, #tpu.memory_space<vmem>>, %arg2: memref<8x32xf32, #tpu.memory_space<vmem>>, %arg3: memref<1x32xf32, #tpu.memory_space<vmem>>, %arg4: memref<1x32xf32, #tpu.memory_space<vmem>>, %arg5: memref<9x32xf32, #tpu.memory_space<vmem>>, %arg6: memref<1x32xf32, #tpu.memory_space<vmem>>, %arg7: memref<1x32xf32, #tpu.memory_space<vmem>>, %arg8: memref<32x8xf32, #tpu.memory_space<vmem>>, %arg9: memref<1x8xf32, #tpu.memory_space<vmem>>, %arg10: memref<1x8xf32, #tpu.memory_space<vmem>>, %arg11: memref<1x16x16x8xf32, #tpu.memory_space<vmem>>, %arg12: memref<18x18x32xf32, #tpu.memory_space<vmem>>) attributes {dimension_semantics = [#tpu.dimension_semantics<parallel>], iteration_bounds = array<i64: 2>, scalar_prefetch = 0 : i64, scratch_operands = 1 : i64, tpu.core_type = #tpu.core_type<tc>, window_params = [{transform_indices = @transform_0, window_bounds = array<i64: 1, 16, 16, 8>}, {pipeline_mode = #tpu.pipeline_mode<synchronous>, transform_indices = @transform_1, window_bounds = array<i64: 8, 32>}, {pipeline_mode = #tpu.pipeline_mode<synchronous>, transform_indices = @transform_2, window_bounds = array<i64: 1, 32>}, {pipeline_mode = #tpu.pipeline_mode<synchronous>, transform_indices = @transform_3, window_bounds = array<i64: 1, 32>}, {pipeline_mode = #tpu.pipeline_mode<synchronous>, transform_indices = @transform_4, window_bounds = array<i64: 9, 32>}, {pipeline_mode = #tpu.pipeline_mode<synchronous>, transform_indices = @transform_5, window_bounds = array<i64: 1, 32>}, {pipeline_mode = #tpu.pipeline_mode<synchronous>, transform_indices = @transform_6, window_bounds = array<i64: 1, 32>}, {pipeline_mode = #tpu.pipeline_mode<synchronous>, transform_indices = @transform_7, window_bounds = array<i64: 32, 8>}, {pipeline_mode = #tpu.pipeline_mode<synchronous>, transform_indices = @transform_8, window_bounds = array<i64: 1, 8>}, {pipeline_mode = #tpu.pipeline_mode<synchronous>, transform_indices = @transform_9, window_bounds = array<i64: 1, 8>}, {transform_indices = @transform_10, window_bounds = array<i64: 1, 16, 16, 8>}]} {
    %cst = arith.constant 0.000000e+00 : f32
    %0 = vector.broadcast %cst : f32 to vector<1x18x32xf32>
    %cst_0 = arith.constant 0.000000e+00 : f32
    %1 = vector.broadcast %cst_0 : f32 to vector<18x1x32xf32>
    %c0 = arith.constant 0 : index
    %c0_1 = arith.constant 0 : index
    %c0_2 = arith.constant 0 : index
    %2 = vector.load %arg12[%c0, %c0_1, %c0_2] : memref<18x18x32xf32, #tpu.memory_space<vmem>>, vector<1x18x32xf32>
    tpu.vector_store %arg12[%c0, %c0_1, %c0_2], %0 {strides = array<i32>} : memref<18x18x32xf32, #tpu.memory_space<vmem>>, vector<1x18x32xf32>,
    %c17 = arith.constant 17 : index
    %c0_3 = arith.constant 0 : index
    %c0_4 = arith.constant 0 : index
    %3 = vector.load %arg12[%c17, %c0_3, %c0_4] : memref<18x18x32xf32, #tpu.memory_space<vmem>>, vector<1x18x32xf32>
    tpu.vector_store %arg12[%c17, %c0_3, %c0_4], %0 {strides = array<i32>} : memref<18x18x32xf32, #tpu.memory_space<vmem>>, vector<1x18x32xf32>,
    %c0_5 = arith.constant 0 : index
    %c0_6 = arith.constant 0 : index
    %c0_7 = arith.constant 0 : index
    %4 = vector.load %arg12[%c0_5, %c0_6, %c0_7] : memref<18x18x32xf32, #tpu.memory_space<vmem>>, vector<18x1x32xf32>
    tpu.vector_store %arg12[%c0_5, %c0_6, %c0_7], %1 {strides = array<i32>} : memref<18x18x32xf32, #tpu.memory_space<vmem>>, vector<18x1x32xf32>,
    %c0_8 = arith.constant 0 : index
    %c17_9 = arith.constant 17 : index
    %c0_10 = arith.constant 0 : index
    %5 = vector.load %arg12[%c0_8, %c17_9, %c0_10] : memref<18x18x32xf32, #tpu.memory_space<vmem>>, vector<18x1x32xf32>
    tpu.vector_store %arg12[%c0_8, %c17_9, %c0_10], %1 {strides = array<i32>} : memref<18x18x32xf32, #tpu.memory_space<vmem>>, vector<18x1x32xf32>,
    %c0_11 = arith.constant 0 : index
    %c0_12 = arith.constant 0 : index
    %c0_13 = arith.constant 0 : index
    %c0_14 = arith.constant 0 : index
    %6 = vector.load %arg1[%c0_11, %c0_12, %c0_13, %c0_14] : memref<1x16x16x8xf32, #tpu.memory_space<vmem>>, vector<1x16x16x8xf32>
    %7 = vector.shape_cast %6 : vector<1x16x16x8xf32> to vector<16x16x8xf32>
    %8 = vector.shape_cast %7 : vector<16x16x8xf32> to vector<256x8xf32>
    %c0_15 = arith.constant 0 : index
    %c0_16 = arith.constant 0 : index
    %9 = vector.load %arg2[%c0_15, %c0_16] : memref<8x32xf32, #tpu.memory_space<vmem>>, vector<8x32xf32>
    %cst_17 = arith.constant dense<0.000000e+00> : vector<256x32xf32>
    %10 = tpu.matmul %8, %9, %cst_17 {dimension_numbers = #tpu.dot_dimension_numbers<[1], [0], [0], [1], [0, 0, 1, 1], [], []>} : vector<256x8xf32>, vector<8x32xf32>, vector<256x32xf32> -> vector<256x32xf32>
    %c0_18 = arith.constant 0 : index
    %c0_19 = arith.constant 0 : index
    %11 = vector.load %arg3[%c0_18, %c0_19] : memref<1x32xf32, #tpu.memory_space<vmem>>, vector<1x32xf32>
    %12 = vector.broadcast %11 : vector<1x32xf32> to vector<256x32xf32>
    %13 = arith.mulf %10, %12 : vector<256x32xf32>
    %c0_20 = arith.constant 0 : index
    %c0_21 = arith.constant 0 : index
    %14 = vector.load %arg4[%c0_20, %c0_21] : memref<1x32xf32, #tpu.memory_space<vmem>>, vector<1x32xf32>
    %15 = vector.broadcast %14 : vector<1x32xf32> to vector<256x32xf32>
    %16 = arith.addf %13, %15 : vector<256x32xf32>
    %cst_22 = arith.constant 0.000000e+00 : f32
    %cst_23 = arith.constant 6.000000e+00 : f32
    %17 = vector.broadcast %cst_22 : f32 to vector<256x32xf32>
    %18 = arith.maximumf %17, %16 : vector<256x32xf32>
    %19 = vector.broadcast %cst_23 : f32 to vector<256x32xf32>
    %20 = arith.minimumf %19, %18 : vector<256x32xf32>
    %21 = vector.shape_cast %20 : vector<256x32xf32> to vector<16x16x32xf32>
    %c1 = arith.constant 1 : index
    %c1_24 = arith.constant 1 : index
    %c0_25 = arith.constant 0 : index
    %22 = vector.load %arg12[%c1, %c1_24, %c0_25] : memref<18x18x32xf32, #tpu.memory_space<vmem>>, vector<16x16x32xf32>
    tpu.vector_store %arg12[%c1, %c1_24, %c0_25], %21 {strides = array<i32>} : memref<18x18x32xf32, #tpu.memory_space<vmem>>, vector<16x16x32xf32>,
    %c0_26 = arith.constant 0 : index
    %c0_27 = arith.constant 0 : index
    %23 = vector.load %arg5[%c0_26, %c0_27] : memref<9x32xf32, #tpu.memory_space<vmem>>, vector<9x32xf32>
    %cst_28 = arith.constant 0.000000e+00 : f32
    %24 = vector.broadcast %cst_28 : f32 to vector<16x16x32xf32>
    %c0_29 = arith.constant 0 : index
    %c0_30 = arith.constant 0 : index
    %c0_31 = arith.constant 0 : index
    %25 = vector.load %arg12[%c0_29, %c0_30, %c0_31] : memref<18x18x32xf32, #tpu.memory_space<vmem>>, vector<16x16x32xf32>
    %26 = vector.extract_strided_slice %23 {offsets = [0, 0], sizes = [1, 32], strides = [1, 1]} : vector<9x32xf32> to vector<1x32xf32>
    %27 = vector.shape_cast %26 : vector<1x32xf32> to vector<1x1x32xf32>
    %28 = vector.broadcast %27 : vector<1x1x32xf32> to vector<16x16x32xf32>
    %29 = arith.mulf %25, %28 : vector<16x16x32xf32>
    %30 = arith.addf %24, %29 : vector<16x16x32xf32>
    %c0_32 = arith.constant 0 : index
    %c1_33 = arith.constant 1 : index
    %c0_34 = arith.constant 0 : index
    %31 = vector.load %arg12[%c0_32, %c1_33, %c0_34] : memref<18x18x32xf32, #tpu.memory_space<vmem>>, vector<16x16x32xf32>
    %32 = vector.extract_strided_slice %23 {offsets = [1, 0], sizes = [1, 32], strides = [1, 1]} : vector<9x32xf32> to vector<1x32xf32>
    %33 = vector.shape_cast %32 : vector<1x32xf32> to vector<1x1x32xf32>
    %34 = vector.broadcast %33 : vector<1x1x32xf32> to vector<16x16x32xf32>
    %35 = arith.mulf %31, %34 : vector<16x16x32xf32>
    %36 = arith.addf %30, %35 : vector<16x16x32xf32>
    %c0_35 = arith.constant 0 : index
    %c2 = arith.constant 2 : index
    %c0_36 = arith.constant 0 : index
    %37 = vector.load %arg12[%c0_35, %c2, %c0_36] : memref<18x18x32xf32, #tpu.memory_space<vmem>>, vector<16x16x32xf32>
    %38 = vector.extract_strided_slice %23 {offsets = [2, 0], sizes = [1, 32], strides = [1, 1]} : vector<9x32xf32> to vector<1x32xf32>
    %39 = vector.shape_cast %38 : vector<1x32xf32> to vector<1x1x32xf32>
    %40 = vector.broadcast %39 : vector<1x1x32xf32> to vector<16x16x32xf32>
    %41 = arith.mulf %37, %40 : vector<16x16x32xf32>
    %42 = arith.addf %36, %41 : vector<16x16x32xf32>
    %c1_37 = arith.constant 1 : index
    %c0_38 = arith.constant 0 : index
    %c0_39 = arith.constant 0 : index
    %43 = vector.load %arg12[%c1_37, %c0_38, %c0_39] : memref<18x18x32xf32, #tpu.memory_space<vmem>>, vector<16x16x32xf32>
    %44 = vector.extract_strided_slice %23 {offsets = [3, 0], sizes = [1, 32], strides = [1, 1]} : vector<9x32xf32> to vector<1x32xf32>
    %45 = vector.shape_cast %44 : vector<1x32xf32> to vector<1x1x32xf32>
    %46 = vector.broadcast %45 : vector<1x1x32xf32> to vector<16x16x32xf32>
    %47 = arith.mulf %43, %46 : vector<16x16x32xf32>
    %48 = arith.addf %42, %47 : vector<16x16x32xf32>
    %c1_40 = arith.constant 1 : index
    %c1_41 = arith.constant 1 : index
    %c0_42 = arith.constant 0 : index
    %49 = vector.load %arg12[%c1_40, %c1_41, %c0_42] : memref<18x18x32xf32, #tpu.memory_space<vmem>>, vector<16x16x32xf32>
    %50 = vector.extract_strided_slice %23 {offsets = [4, 0], sizes = [1, 32], strides = [1, 1]} : vector<9x32xf32> to vector<1x32xf32>
    %51 = vector.shape_cast %50 : vector<1x32xf32> to vector<1x1x32xf32>
    %52 = vector.broadcast %51 : vector<1x1x32xf32> to vector<16x16x32xf32>
    %53 = arith.mulf %49, %52 : vector<16x16x32xf32>
    %54 = arith.addf %48, %53 : vector<16x16x32xf32>
    %c1_43 = arith.constant 1 : index
    %c2_44 = arith.constant 2 : index
    %c0_45 = arith.constant 0 : index
    %55 = vector.load %arg12[%c1_43, %c2_44, %c0_45] : memref<18x18x32xf32, #tpu.memory_space<vmem>>, vector<16x16x32xf32>
    %56 = vector.extract_strided_slice %23 {offsets = [5, 0], sizes = [1, 32], strides = [1, 1]} : vector<9x32xf32> to vector<1x32xf32>
    %57 = vector.shape_cast %56 : vector<1x32xf32> to vector<1x1x32xf32>
    %58 = vector.broadcast %57 : vector<1x1x32xf32> to vector<16x16x32xf32>
    %59 = arith.mulf %55, %58 : vector<16x16x32xf32>
    %60 = arith.addf %54, %59 : vector<16x16x32xf32>
    %c2_46 = arith.constant 2 : index
    %c0_47 = arith.constant 0 : index
    %c0_48 = arith.constant 0 : index
    %61 = vector.load %arg12[%c2_46, %c0_47, %c0_48] : memref<18x18x32xf32, #tpu.memory_space<vmem>>, vector<16x16x32xf32>
    %62 = vector.extract_strided_slice %23 {offsets = [6, 0], sizes = [1, 32], strides = [1, 1]} : vector<9x32xf32> to vector<1x32xf32>
    %63 = vector.shape_cast %62 : vector<1x32xf32> to vector<1x1x32xf32>
    %64 = vector.broadcast %63 : vector<1x1x32xf32> to vector<16x16x32xf32>
    %65 = arith.mulf %61, %64 : vector<16x16x32xf32>
    %66 = arith.addf %60, %65 : vector<16x16x32xf32>
    %c2_49 = arith.constant 2 : index
    %c1_50 = arith.constant 1 : index
    %c0_51 = arith.constant 0 : index
    %67 = vector.load %arg12[%c2_49, %c1_50, %c0_51] : memref<18x18x32xf32, #tpu.memory_space<vmem>>, vector<16x16x32xf32>
    %68 = vector.extract_strided_slice %23 {offsets = [7, 0], sizes = [1, 32], strides = [1, 1]} : vector<9x32xf32> to vector<1x32xf32>
    %69 = vector.shape_cast %68 : vector<1x32xf32> to vector<1x1x32xf32>
    %70 = vector.broadcast %69 : vector<1x1x32xf32> to vector<16x16x32xf32>
    %71 = arith.mulf %67, %70 : vector<16x16x32xf32>
    %72 = arith.addf %66, %71 : vector<16x16x32xf32>
    %c2_52 = arith.constant 2 : index
    %c2_53 = arith.constant 2 : index
    %c0_54 = arith.constant 0 : index
    %73 = vector.load %arg12[%c2_52, %c2_53, %c0_54] : memref<18x18x32xf32, #tpu.memory_space<vmem>>, vector<16x16x32xf32>
    %74 = vector.extract_strided_slice %23 {offsets = [8, 0], sizes = [1, 32], strides = [1, 1]} : vector<9x32xf32> to vector<1x32xf32>
    %75 = vector.shape_cast %74 : vector<1x32xf32> to vector<1x1x32xf32>
    %76 = vector.broadcast %75 : vector<1x1x32xf32> to vector<16x16x32xf32>
    %77 = arith.mulf %73, %76 : vector<16x16x32xf32>
    %78 = arith.addf %72, %77 : vector<16x16x32xf32>
    %c0_55 = arith.constant 0 : index
    %c0_56 = arith.constant 0 : index
    %79 = vector.load %arg6[%c0_55, %c0_56] : memref<1x32xf32, #tpu.memory_space<vmem>>, vector<1x32xf32>
    %80 = vector.shape_cast %79 : vector<1x32xf32> to vector<1x1x32xf32>
    %81 = vector.broadcast %80 : vector<1x1x32xf32> to vector<16x16x32xf32>
    %82 = arith.mulf %78, %81 : vector<16x16x32xf32>
    %c0_57 = arith.constant 0 : index
    %c0_58 = arith.constant 0 : index
    %83 = vector.load %arg7[%c0_57, %c0_58] : memref<1x32xf32, #tpu.memory_space<vmem>>, vector<1x32xf32>
    %84 = vector.shape_cast %83 : vector<1x32xf32> to vector<1x1x32xf32>
    %85 = vector.broadcast %84 : vector<1x1x32xf32> to vector<16x16x32xf32>
    %86 = arith.addf %82, %85 : vector<16x16x32xf32>
    %cst_59 = arith.constant 0.000000e+00 : f32
    %cst_60 = arith.constant 6.000000e+00 : f32
    %87 = vector.broadcast %cst_59 : f32 to vector<16x16x32xf32>
    %88 = arith.maximumf %87, %86 : vector<16x16x32xf32>
    %89 = vector.broadcast %cst_60 : f32 to vector<16x16x32xf32>
    %90 = arith.minimumf %89, %88 : vector<16x16x32xf32>
    %91 = vector.shape_cast %90 : vector<16x16x32xf32> to vector<256x32xf32>
    %c0_61 = arith.constant 0 : index
    %c0_62 = arith.constant 0 : index
    %92 = vector.load %arg8[%c0_61, %c0_62] : memref<32x8xf32, #tpu.memory_space<vmem>>, vector<32x8xf32>
    %cst_63 = arith.constant dense<0.000000e+00> : vector<256x8xf32>
    %93 = tpu.matmul %91, %92, %cst_63 {dimension_numbers = #tpu.dot_dimension_numbers<[1], [0], [0], [1], [0, 0, 1, 1], [], []>} : vector<256x32xf32>, vector<32x8xf32>, vector<256x8xf32> -> vector<256x8xf32>
    %c0_64 = arith.constant 0 : index
    %c0_65 = arith.constant 0 : index
    %94 = vector.load %arg9[%c0_64, %c0_65] : memref<1x8xf32, #tpu.memory_space<vmem>>, vector<1x8xf32>
    %95 = vector.broadcast %94 : vector<1x8xf32> to vector<256x8xf32>
    %96 = arith.mulf %93, %95 : vector<256x8xf32>
    %c0_66 = arith.constant 0 : index
    %c0_67 = arith.constant 0 : index
    %97 = vector.load %arg10[%c0_66, %c0_67] : memref<1x8xf32, #tpu.memory_space<vmem>>, vector<1x8xf32>
    %98 = vector.broadcast %97 : vector<1x8xf32> to vector<256x8xf32>
    %99 = arith.addf %96, %98 : vector<256x8xf32>
    %100 = arith.addf %99, %8 : vector<256x8xf32>
    %101 = vector.shape_cast %100 : vector<256x8xf32> to vector<16x16x8xf32>
    %c0_68 = arith.constant 0 : index
    %c0_69 = arith.constant 0 : index
    %c0_70 = arith.constant 0 : index
    %c0_71 = arith.constant 0 : index
    %102 = vector.load %arg11[%c0_68, %c0_69, %c0_70, %c0_71] : memref<1x16x16x8xf32, #tpu.memory_space<vmem>>, vector<1x16x16x8xf32>
    %103 = vector.shape_cast %102 : vector<1x16x16x8xf32> to vector<16x16x8xf32>
    %104 = vector.shape_cast %101 : vector<16x16x8xf32> to vector<1x16x16x8xf32>
    tpu.vector_store %arg11[%c0_68, %c0_69, %c0_70, %c0_71], %104 {strides = array<i32>} : memref<1x16x16x8xf32, #tpu.memory_space<vmem>>, vector<1x16x16x8xf32>,
    return
  }
  func.func @transform_0(%arg0: i32) -> (i32, i32, i32, i32) {
    %c0_i32 = arith.constant 0 : i32
    %c0_i32_0 = arith.constant 0 : i32
    %c0_i32_1 = arith.constant 0 : i32
    %c0_i32_2 = arith.constant 0 : i32
    return %arg0, %c0_i32, %c0_i32_0, %c0_i32_1 : i32, i32, i32, i32
  }
  func.func @transform_1(%arg0: i32) -> (i32, i32) {
    %c0_i32 = arith.constant 0 : i32
    %c0_i32_0 = arith.constant 0 : i32
    %c0_i32_1 = arith.constant 0 : i32
    return %c0_i32, %c0_i32_0 : i32, i32
  }
  func.func @transform_2(%arg0: i32) -> (i32, i32) {
    %c0_i32 = arith.constant 0 : i32
    %c0_i32_0 = arith.constant 0 : i32
    %c0_i32_1 = arith.constant 0 : i32
    return %c0_i32, %c0_i32_0 : i32, i32
  }
  func.func @transform_3(%arg0: i32) -> (i32, i32) {
    %c0_i32 = arith.constant 0 : i32
    %c0_i32_0 = arith.constant 0 : i32
    %c0_i32_1 = arith.constant 0 : i32
    return %c0_i32, %c0_i32_0 : i32, i32
  }
  func.func @transform_4(%arg0: i32) -> (i32, i32) {
    %c0_i32 = arith.constant 0 : i32
    %c0_i32_0 = arith.constant 0 : i32
    %c0_i32_1 = arith.constant 0 : i32
    return %c0_i32, %c0_i32_0 : i32, i32
  }
  func.func @transform_5(%arg0: i32) -> (i32, i32) {
    %c0_i32 = arith.constant 0 : i32
    %c0_i32_0 = arith.constant 0 : i32
    %c0_i32_1 = arith.constant 0 : i32
    return %c0_i32, %c0_i32_0 : i32, i32
  }
  func.func @transform_6(%arg0: i32) -> (i32, i32) {
    %c0_i32 = arith.constant 0 : i32
    %c0_i32_0 = arith.constant 0 : i32
    %c0_i32_1 = arith.constant 0 : i32
    return %c0_i32, %c0_i32_0 : i32, i32
  }
  func.func @transform_7(%arg0: i32) -> (i32, i32) {
    %c0_i32 = arith.constant 0 : i32
    %c0_i32_0 = arith.constant 0 : i32
    %c0_i32_1 = arith.constant 0 : i32
    return %c0_i32, %c0_i32_0 : i32, i32
  }
  func.func @transform_8(%arg0: i32) -> (i32, i32) {
    %c0_i32 = arith.constant 0 : i32
    %c0_i32_0 = arith.constant 0 : i32
    %c0_i32_1 = arith.constant 0 : i32
    return %c0_i32, %c0_i32_0 : i32, i32
  }
  func.func @transform_9(%arg0: i32) -> (i32, i32) {
    %c0_i32 = arith.constant 0 : i32
    %c0_i32_0 = arith.constant 0 : i32
    %c0_i32_1 = arith.constant 0 : i32
    return %c0_i32, %c0_i32_0 : i32, i32
  }
  func.func @transform_10(%arg0: i32) -> (i32, i32, i32, i32) {
    %c0_i32 = arith.constant 0 : i32
    %c0_i32_0 = arith.constant 0 : i32
    %c0_i32_1 = arith.constant 0 : i32
    %c0_i32_2 = arith.constant 0 : i32
    return %arg0, %c0_i32, %c0_i32_0, %c0_i32_1 : i32, i32, i32, i32
  }
}

</mosaic_0001>

<llo_original>
// kernel: inverted_residual_forward.1
$region0: #{inverted_residual_forward.1}
  #allocation0 [shape = 'u32[]', space=smem, size = 0x4, offset = 0x4, fixed_abs, tag = 'smem constant byte address 0x4 - core index']
  #allocation1 [shape = 'u32[144,128]{1,0:T(1,128)}', space=vmem, size = 0x12000, scoped, tag = 'internal scratch']
  #allocation2 [shape = 'f32[18,18,32]{2,1,0:T(8,128)}', space=vmem, size = 0x36000, scoped, tag = 'scratch operand']
  %s0 = inlined_call_operand.vmem [shape: f32[2,16,16,8], index: 0, kind: input, shape index: {}]
  %s1 = inlined_call_operand.vmem [shape: f32[8,32], index: 1, kind: input, shape index: {}]
  %s2 = inlined_call_operand.vmem [shape: f32[1,32], index: 2, kind: input, shape index: {}]
  %s3 = inlined_call_operand.vmem [shape: f32[1,32], index: 3, kind: input, shape index: {}]
  %s4 = inlined_call_operand.vmem [shape: f32[9,32], index: 4, kind: input, shape index: {}]
  %s5 = inlined_call_operand.vmem [shape: f32[1,32], index: 5, kind: input, shape index: {}]
  %s6 = inlined_call_operand.vmem [shape: f32[1,32], index: 6, kind: input, shape index: {}]
  %s7 = inlined_call_operand.vmem [shape: f32[32,8], index: 7, kind: input, shape index: {}]
  %s8 = inlined_call_operand.vmem [shape: f32[1,8], index: 8, kind: input, shape index: {}]
  %s9 = inlined_call_operand.vmem [shape: f32[1,8], index: 9, kind: input, shape index: {}]
  %s10 = inlined_call_operand.vmem [shape: f32[2,16,16,8], index: 10, kind: output, shape index: {}]
  %s11 = sld [smem:[#allocation0]]
  $region73: #{inverted_residual_forward.1} parent=0
    _
  %s13 = ssub.s32 1, %s11
  %s14 = scalar_select 0, %s13, %s11
  loop: start=0, step=1, limit=4
  $region2: #{inverted_residual_forward.1} parent=0 // loop_pre_header
    _
  $region3: #{inverted_residual_forward.1} parent=0 // loop_header
    %s16 = sphi 0, %s20
    %p17 = scmp.ge.s32.totalorder %s16, 4
    %s26 = sphi 0, %s28
    %s29 = sphi 0, %s26
    %s30 = sphi 0, %s29
    %s46 = sphi 0, %s30
    %s50 = sphi 0, %s50
    %s52 = sphi 0, %s50
    %s53 = sphi 0, %s52
    %s67 = sphi 0, %s53
    %s71 = sphi 0, %s71
    %s73 = sphi 0, %s71
    %s74 = sphi 0, %s73
    %s88 = sphi 0, %s74
    %s92 = sphi 0, %s92
    %s94 = sphi 0, %s92
    %s95 = sphi 0, %s94
    %s109 = sphi 0, %s95
    %s113 = sphi 0, %s113
    %s115 = sphi 0, %s113
    %s116 = sphi 0, %s115
    %s130 = sphi 0, %s116
    %s134 = sphi 0, %s134
    %s136 = sphi 0, %s134
    %s137 = sphi 0, %s136
    %s151 = sphi 0, %s137
    %s155 = sphi 0, %s155
    %s157 = sphi 0, %s155
    %s158 = sphi 0, %s157
    %s172 = sphi 0, %s158
    %s176 = sphi 0, %s176
    %s178 = sphi 0, %s176
    %s179 = sphi 0, %s178
    %s193 = sphi 0, %s179
    %s197 = sphi 0, %s197
    %s199 = sphi 0, %s197
    %s200 = sphi 0, %s199
    %s214 = sphi 0, %s200
    %s218 = sphi 0, %s218
    %s220 = sphi 0, %s218
    %s221 = sphi 0, %s220
    %s235 = sphi 0, %s221
    %s241 = sphi 0, %s243
    %s244 = sphi 0, %s241
    %s245 = sphi 0, %s244
    %s261 = sphi 0, %s245
  $region4: #{inverted_residual_forward.1} parent=0 // loop_header_branch
    %19 = sbr.rel (%p17) target = $region8
  $region5: #{inverted_residual_forward.1} parent=0 // loop_body
    %s21 = ssub.s32 %s16, 1
    %s22 = ssub.s32 %s16, 2
    %s23 = sadd.s32 %s16, 1
    %s24 = ssub.s32 %s16, %s23
    %p25 = scmp.eq.s32.totalorder %s24, 0
    %s27 = sadd.s32 %s26, 1
    %s28 = scalar_select %p25, %s26, %s27
    %p31 = pneg %p25
    %p32 = scmp.eq.s32.totalorder %s16, 1
    %p33 = por %p31, %p32
    %p34 = scmp.ne.s32.totalorder %s26, %s29
    %p35 = scmp.eq.s32.totalorder %s16, 0
    %p36 = por %p34, %p35
    %p37 = scmp.ne.s32.totalorder %s26, %s29
    %p38 = scmp.eq.s32.totalorder %s21, 1
    %p39 = por %p37, %p38
    %p40 = scmp.ne.s32.totalorder %s29, %s30
    %p41 = scmp.eq.s32.totalorder %s21, 0
    %p42 = por %p40, %p41
    %p43 = scmp.ne.s32.totalorder %s29, %s30
    %p44 = scmp.eq.s32.totalorder %s22, 1
    %p45 = por %p43, %p44
    %p47 = scmp.ne.s32.totalorder %s30, %s46
    %p48 = scmp.eq.s32.totalorder %s22, 0
    %p49 = por %p47, %p48
    %s51 = sadd.s32 %s50, 1
    %p54 = scmp.eq.s32.totalorder %s16, 1
    %p55 = scmp.ne.s32.totalorder %s50, %s52
    %p56 = scmp.eq.s32.totalorder %s16, 0
    %p57 = por %p55, %p56
    %p58 = scmp.ne.s32.totalorder %s50, %s52
    %p59 = scmp.eq.s32.totalorder %s21, 1
    %p60 = por %p58, %p59
    %p61 = scmp.ne.s32.totalorder %s52, %s53
    %p62 = scmp.eq.s32.totalorder %s21, 0
    %p63 = por %p61, %p62
    %p64 = scmp.ne.s32.totalorder %s52, %s53
    %p65 = scmp.eq.s32.totalorder %s22, 1
    %p66 = por %p64, %p65
    %p68 = scmp.ne.s32.totalorder %s53, %s67
    %p69 = scmp.eq.s32.totalorder %s22, 0
    %p70 = por %p68, %p69
    %s72 = sadd.s32 %s71, 1
    %p75 = scmp.eq.s32.totalorder %s16, 1
    %p76 = scmp.ne.s32.totalorder %s71, %s73
    %p77 = scmp.eq.s32.totalorder %s16, 0
    %p78 = por %p76, %p77
    %p79 = scmp.ne.s32.totalorder %s71, %s73
    %p80 = scmp.eq.s32.totalorder %s21, 1
    %p81 = por %p79, %p80
    %p82 = scmp.ne.s32.totalorder %s73, %s74
    %p83 = scmp.eq.s32.totalorder %s21, 0
    %p84 = por %p82, %p83
    %p85 = scmp.ne.s32.totalorder %s73, %s74
    %p86 = scmp.eq.s32.totalorder %s22, 1
    %p87 = por %p85, %p86
    %p89 = scmp.ne.s32.totalorder %s74, %s88
    %p90 = scmp.eq.s32.totalorder %s22, 0
    %p91 = por %p89, %p90
    %s93 = sadd.s32 %s92, 1
    %p96 = scmp.eq.s32.totalorder %s16, 1
    %p97 = scmp.ne.s32.totalorder %s92, %s94
    %p98 = scmp.eq.s32.totalorder %s16, 0
    %p99 = por %p97, %p98
    %p100 = scmp.ne.s32.totalorder %s92, %s94
    %p101 = scmp.eq.s32.totalorder %s21, 1
    %p102 = por %p100, %p101
    %p103 = scmp.ne.s32.totalorder %s94, %s95
    %p104 = scmp.eq.s32.totalorder %s21, 0
    %p105 = por %p103, %p104
    %p106 = scmp.ne.s32.totalorder %s94, %s95
    %p107 = scmp.eq.s32.totalorder %s22, 1
    %p108 = por %p106, %p107
    %p110 = scmp.ne.s32.totalorder %s95, %s109
    %p111 = scmp.eq.s32.totalorder %s22, 0
    %p112 = por %p110, %p111
    %s114 = sadd.s32 %s113, 1
    %p117 = scmp.eq.s32.totalorder %s16, 1
    %p118 = scmp.ne.s32.totalorder %s113, %s115
    %p119 = scmp.eq.s32.totalorder %s16, 0
    %p120 = por %p118, %p119
    %p121 = scmp.ne.s32.totalorder %s113, %s115
    %p122 = scmp.eq.s32.totalorder %s21, 1
    %p123 = por %p121, %p122
    %p124 = scmp.ne.s32.totalorder %s115, %s116
    %p125 = scmp.eq.s32.totalorder %s21, 0
    %p126 = por %p124, %p125
    %p127 = scmp.ne.s32.totalorder %s115, %s116
    %p128 = scmp.eq.s32.totalorder %s22, 1
    %p129 = por %p127, %p128
    %p131 = scmp.ne.s32.totalorder %s116, %s130
    %p132 = scmp.eq.s32.totalorder %s22, 0
    %p133 = por %p131, %p132
    %s135 = sadd.s32 %s134, 1
    %p138 = scmp.eq.s32.totalorder %s16, 1
    %p139 = scmp.ne.s32.totalorder %s134, %s136
    %p140 = scmp.eq.s32.totalorder %s16, 0
    %p141 = por %p139, %p140
    %p142 = scmp.ne.s32.totalorder %s134, %s136
    %p143 = scmp.eq.s32.totalorder %s21, 1
    %p144 = por %p142, %p143
    %p145 = scmp.ne.s32.totalorder %s136, %s137
    %p146 = scmp.eq.s32.totalorder %s21, 0
    %p147 = por %p145, %p146
    %p148 = scmp.ne.s32.totalorder %s136, %s137
    %p149 = scmp.eq.s32.totalorder %s22, 1
    %p150 = por %p148, %p149
    %p152 = scmp.ne.s32.totalorder %s137, %s151
    %p153 = scmp.eq.s32.totalorder %s22, 0
    %p154 = por %p152, %p153
    %s156 = sadd.s32 %s155, 1
    %p159 = scmp.eq.s32.totalorder %s16, 1
    %p160 = scmp.ne.s32.totalorder %s155, %s157
    %p161 = scmp.eq.s32.totalorder %s16, 0
    %p162 = por %p160, %p161
    %p163 = scmp.ne.s32.totalorder %s155, %s157
    %p164 = scmp.eq.s32.totalorder %s21, 1
    %p165 = por %p163, %p164
    %p166 = scmp.ne.s32.totalorder %s157, %s158
    %p167 = scmp.eq.s32.totalorder %s21, 0
    %p168 = por %p166, %p167
    %p169 = scmp.ne.s32.totalorder %s157, %s158
    %p170 = scmp.eq.s32.totalorder %s22, 1
    %p171 = por %p169, %p170
    %p173 = scmp.ne.s32.totalorder %s158, %s172
    %p174 = scmp.eq.s32.totalorder %s22, 0
    %p175 = por %p173, %p174
    %s177 = sadd.s32 %s176, 1
    %p180 = scmp.eq.s32.totalorder %s16, 1
    %p181 = scmp.ne.s32.totalorder %s176, %s178
    %p182 = scmp.eq.s32.totalorder %s16, 0
    %p183 = por %p181, %p182
    %p184 = scmp.ne.s32.totalorder %s176, %s178
    %p185 = scmp.eq.s32.totalorder %s21, 1
    %p186 = por %p184, %p185
    %p187 = scmp.ne.s32.totalorder %s178, %s179
    %p188 = scmp.eq.s32.totalorder %s21, 0
    %p189 = por %p187, %p188
    %p190 = scmp.ne.s32.totalorder %s178, %s179
    %p191 = scmp.eq.s32.totalorder %s22, 1
    %p192 = por %p190, %p191
    %p194 = scmp.ne.s32.totalorder %s179, %s193
    %p195 = scmp.eq.s32.totalorder %s22, 0
    %p196 = por %p194, %p195
    %s198 = sadd.s32 %s197, 1
    %p201 = scmp.eq.s32.totalorder %s16, 1
    %p202 = scmp.ne.s32.totalorder %s197, %s199
    %p203 = scmp.eq.s32.totalorder %s16, 0
    %p204 = por %p202, %p203
    %p205 = scmp.ne.s32.totalorder %s197, %s199
    %p206 = scmp.eq.s32.totalorder %s21, 1
    %p207 = por %p205, %p206
    %p208 = scmp.ne.s32.totalorder %s199, %s200
    %p209 = scmp.eq.s32.totalorder %s21, 0
    %p210 = por %p208, %p209
    %p211 = scmp.ne.s32.totalorder %s199, %s200
    %p212 = scmp.eq.s32.totalorder %s22, 1
    %p213 = por %p211, %p212
    %p215 = scmp.ne.s32.totalorder %s200, %s214
    %p216 = scmp.eq.s32.totalorder %s22, 0
    %p217 = por %p215, %p216
    %s219 = sadd.s32 %s218, 1
    %p222 = scmp.eq.s32.totalorder %s16, 1
    %p223 = scmp.ne.s32.totalorder %s218, %s220
    %p224 = scmp.eq.s32.totalorder %s16, 0
    %p225 = por %p223, %p224
    %p226 = scmp.ne.s32.totalorder %s218, %s220
    %p227 = scmp.eq.s32.totalorder %s21, 1
    %p228 = por %p226, %p227
    %p229 = scmp.ne.s32.totalorder %s220, %s221
    %p230 = scmp.eq.s32.totalorder %s21, 0
    %p231 = por %p229, %p230
    %p232 = scmp.ne.s32.totalorder %s220, %s221
    %p233 = scmp.eq.s32.totalorder %s22, 1
    %p234 = por %p232, %p233
    %p236 = scmp.ne.s32.totalorder %s221, %s235
    %p237 = scmp.eq.s32.totalorder %s22, 0
    %p238 = por %p236, %p237
    %s239 = ssub.s32 %s16, %s23
    %p240 = scmp.eq.s32.totalorder %s239, 0
    %s242 = sadd.s32 %s241, 1
    %s243 = scalar_select %p240, %s241, %s242
    %p246 = pneg %p240
    %p247 = scmp.eq.s32.totalorder %s16, 1
    %p248 = por %p246, %p247
    %p249 = scmp.ne.s32.totalorder %s241, %s244
    %p250 = scmp.eq.s32.totalorder %s16, 0
    %p251 = por %p249, %p250
    %p252 = scmp.ne.s32.totalorder %s241, %s244
    %p253 = scmp.eq.s32.totalorder %s21, 1
    %p254 = por %p252, %p253
    %p255 = scmp.ne.s32.totalorder %s244, %s245
    %p256 = scmp.eq.s32.totalorder %s21, 0
    %p257 = por %p255, %p256
    %p258 = scmp.ne.s32.totalorder %s244, %s245
    %p259 = scmp.eq.s32.totalorder %s22, 1
    %p260 = por %p258, %p259
    %p262 = scmp.ne.s32.totalorder %s245, %s261
    %p263 = scmp.eq.s32.totalorder %s22, 0
    %p264 = por %p262, %p263
    %p265 = scmp.le.s32.totalorder 1, %s16
    %p266 = scmp.lt.s32.totalorder %s16, 3
    %p267 = pnand %p265, %p266
    %p268 = pneg %p267
    // Predicated region
    $region9: #{inverted_residual_forward.1} parent=5 // pred_check
      _
    $region10: #{inverted_residual_forward.1} parent=5 // pred_check_branch
      %270 = sbr.rel (%p267) target = $region12
    $region11: #{inverted_residual_forward.1} parent=5 // pred_region
      %s271 = ssub.s32 %s16, 1
      // Predicated region
      $region13: #{inverted_residual_forward.1} parent=11 // pred_check
        %p272 = pneg %p63
      $region14: #{inverted_residual_forward.1} parent=11 // pred_check_branch
        %274 = sbr.rel (%p272) target = $region16
      $region15: #{inverted_residual_forward.1} parent=11 // pred_region
        _
      $region16: #{inverted_residual_forward.1} parent=11 // pred_fallthru
        _
      // Predicated region
      $region17: #{inverted_residual_forward.1} parent=11 // pred_check
        %p275 = pneg %p84
      $region18: #{inverted_residual_forward.1} parent=11 // pred_check_branch
        %277 = sbr.rel (%p275) target = $region20
      $region19: #{inverted_residual_forward.1} parent=11 // pred_region
        _
      $region20: #{inverted_residual_forward.1} parent=11 // pred_fallthru
        _
      // Predicated region
      $region21: #{inverted_residual_forward.1} parent=11 // pred_check
        %p278 = pneg %p105
      $region22: #{inverted_residual_forward.1} parent=11 // pred_check_branch
        %280 = sbr.rel (%p278) target = $region24
      $region23: #{inverted_residual_forward.1} parent=11 // pred_region
        _
      $region24: #{inverted_residual_forward.1} parent=11 // pred_fallthru
        _
      // Predicated region
      $region25: #{inverted_residual_forward.1} parent=11 // pred_check
        %p281 = pneg %p126
      $region26: #{inverted_residual_forward.1} parent=11 // pred_check_branch
        %283 = sbr.rel (%p281) target = $region28
      $region27: #{inverted_residual_forward.1} parent=11 // pred_region
        _
      $region28: #{inverted_residual_forward.1} parent=11 // pred_fallthru
        _
      // Predicated region
      $region29: #{inverted_residual_forward.1} parent=11 // pred_check
        %p284 = pneg %p147
      $region30: #{inverted_residual_forward.1} parent=11 // pred_check_branch
        %286 = sbr.rel (%p284) target = $region32
      $region31: #{inverted_residual_forward.1} parent=11 // pred_region
        _
      $region32: #{inverted_residual_forward.1} parent=11 // pred_fallthru
        _
      // Predicated region
      $region33: #{inverted_residual_forward.1} parent=11 // pred_check
        %p287 = pneg %p168
      $region34: #{inverted_residual_forward.1} parent=11 // pred_check_branch
        %289 = sbr.rel (%p287) target = $region36
      $region35: #{inverted_residual_forward.1} parent=11 // pred_region
        _
      $region36: #{inverted_residual_forward.1} parent=11 // pred_fallthru
        _
      // Predicated region
      $region37: #{inverted_residual_forward.1} parent=11 // pred_check
        %p290 = pneg %p189
      $region38: #{inverted_residual_forward.1} parent=11 // pred_check_branch
        %292 = sbr.rel (%p290) target = $region40
      $region39: #{inverted_residual_forward.1} parent=11 // pred_region
        _
      $region40: #{inverted_residual_forward.1} parent=11 // pred_fallthru
        _
      // Predicated region
      $region41: #{inverted_residual_forward.1} parent=11 // pred_check
        %p293 = pneg %p210
      $region42: #{inverted_residual_forward.1} parent=11 // pred_check_branch
        %295 = sbr.rel (%p293) target = $region44
      $region43: #{inverted_residual_forward.1} parent=11 // pred_region
        _
      $region44: #{inverted_residual_forward.1} parent=11 // pred_fallthru
        _
      // Predicated region
      $region45: #{inverted_residual_forward.1} parent=11 // pred_check
        %p296 = pneg %p231
      $region46: #{inverted_residual_forward.1} parent=11 // pred_check_branch
        %298 = sbr.rel (%p296) target = $region48
      $region47: #{inverted_residual_forward.1} parent=11 // pred_region
        _
      $region48: #{inverted_residual_forward.1} parent=11 // pred_fallthru
        _
    $region12: #{inverted_residual_forward.1} parent=5 // pred_fallthru
      _
    %p299 = scmp.lt.s32.totalorder %s16, 2
    // Predicated region
    $region49: #{inverted_residual_forward.1} parent=5 // pred_check
      %p300 = pneg %p299
    $region50: #{inverted_residual_forward.1} parent=5 // pred_check_branch
      %302 = sbr.rel (%p300) target = $region52
    $region51: #{inverted_residual_forward.1} parent=5 // pred_region
      // Predicated region
      $region53: #{inverted_residual_forward.1} parent=51 // pred_check
        %p303 = pneg %p36
      $region54: #{inverted_residual_forward.1} parent=51 // pred_check_branch
        %305 = sbr.rel (%p303) target = $region56
      $region55: #{inverted_residual_forward.1} parent=51 // pred_region
        %p306 = scmp.lt.s32.totalorder %s16, 1
        %s307 = scalar_select %p306, %s16, 1
        %s308 = smul.addr %s307, 32
        %s309 = smul.addr %s308, 8
        %s310 = scalar_lea.vmem %s0, %s309
      $region56: #{inverted_residual_forward.1} parent=51 // pred_fallthru
        _
    $region52: #{inverted_residual_forward.1} parent=5 // pred_fallthru
      _
    %p311 = scmp.le.s32.totalorder 1, %s16
    %p312 = scmp.lt.s32.totalorder %s16, 3
    %p313 = pnand %p311, %p312
    %p314 = pneg %p313
    // Predicated region
    $region57: #{inverted_residual_forward.1} parent=5 // pred_check
      _
    $region58: #{inverted_residual_forward.1} parent=5 // pred_check_branch
      %316 = sbr.rel (%p313) target = $region60
    $region59: #{inverted_residual_forward.1} parent=5 // pred_region
      %s317 = ssub.s32 %s16, 1
      %p318 = scmp.lt.s32.totalorder %s21, 1
      %s319 = scalar_select %p318, %s21, 1
      %s320 = smul.addr %s319, 32
      %s321 = smul.addr %s320, 8
      %s322 = scalar_lea.vmem %s0, %s321
      %p323 = pneg %p42
      %p324 = pneg %p39
      %p325 = pneg %p63
      %p326 = pneg %p60
      %p327 = pneg %p84
      %p328 = pneg %p81
      %p329 = pneg %p105
      %p330 = pneg %p102
      %p331 = pneg %p126
      %p332 = pneg %p123
      %p333 = pneg %p147
      %p334 = pneg %p144
      %p335 = pneg %p168
      %p336 = pneg %p165
      %p337 = pneg %p189
      %p338 = pneg %p186
      %p339 = pneg %p210
      %p340 = pneg %p207
      %p341 = pneg %p231
      %p342 = pneg %p228
      %p343 = pneg %p257
      %p344 = pneg %p254
      %p345 = scmp.lt.s32.totalorder %s21, 1
      %s346 = scalar_select %p345, %s21, 1
      %s347 = smul.addr %s346, 32
      %s348 = smul.addr %s347, 8
      %s349 = scalar_lea.vmem %s10, %s348
      %p350 = scmp.lt.s32.totalorder %s21, 1
      %s351 = scalar_select %p350, %s21, 1
      %s352 = smul.addr %s351, 32
      %s353 = smul.addr %s352, 8
      %s354 = scalar_lea.vmem %s0, %s353
      %p355 = scmp.lt.s32.totalorder %s21, 1
      %s356 = scalar_select %p355, %s21, 1
      %s357 = smul.addr %s356, 32
      %s358 = smul.addr %s357, 8
      %s359 = scalar_lea.vmem %s10, %s358
      %vm360 = vcmask 261120
      %361 = vst.msk [vmem:[#allocation2] sm:$0xff] %vm360, 0.0
      %362 = vst.msk [vmem:[#allocation2 + $0x8] sm:$0xff] %vm360, 0.0
      %vm363 = vcmask 254976
      %364 = vst.msk [vmem:[#allocation2 + $0x10] sm:$0x3] %vm363, 0.0
      %s365 = scalar_lea.vmem [#allocation2], 408
      %366 = vst.msk [vmem:[%s365] sm:$0xff] %vm360, 0.0
      %367 = vst.msk [vmem:[%s365 + $0x8] sm:$0xff] %vm360, 0.0
      %368 = vst.msk [vmem:[%s365 + $0x10] sm:$0x3] %vm363, 0.0
      %vm369 = vcmask 253952
      %370 = vst.msk [vmem:[#allocation2] sm:$0x1] %vm369, 0.0
      %371 = vst.msk [vmem:[#allocation2 + $0x18] sm:$0x1] %vm369, 0.0
      %372 = vst.msk [vmem:[#allocation2 + $0x30] sm:$0x1] %vm369, 0.0
      %373 = vst.msk [vmem:[#allocation2 + $0x48] sm:$0x1] %vm369, 0.0
      %374 = vst.msk [vmem:[#allocation2 + $0x60] sm:$0x1] %vm369, 0.0
      %375 = vst.msk [vmem:[#allocation2 + $0x78] sm:$0x1] %vm369, 0.0
      %376 = vst.msk [vmem:[#allocation2 + $0x90] sm:$0x1] %vm369, 0.0
      %377 = vst.msk [vmem:[#allocation2 + $0xa8] sm:$0x1] %vm369, 0.0
      %378 = vst.msk [vmem:[#allocation2 + $0xc0] sm:$0x1] %vm369, 0.0
      %379 = vst.msk [vmem:[#allocation2 + $0xd8] sm:$0x1] %vm369, 0.0
      %380 = vst.msk [vmem:[#allocation2 + $0xf0] sm:$0x1] %vm369, 0.0
      %381 = vst.msk [vmem:[#allocation2 + $0x108] sm:$0x1] %vm369, 0.0
      %382 = vst.msk [vmem:[#allocation2 + $0x120] sm:$0x1] %vm369, 0.0
      %383 = vst.msk [vmem:[#allocation2 + $0x138] sm:$0x1] %vm369, 0.0
      %384 = vst.msk [vmem:[#allocation2 + $0x150] sm:$0x1] %vm369, 0.0
      %385 = vst.msk [vmem:[#allocation2 + $0x168] sm:$0x1] %vm369, 0.0
      %386 = vst.msk [vmem:[#allocation2 + $0x180] sm:$0x1] %vm369, 0.0
      %387 = vst.msk [vmem:[#allocation2 + $0x198] sm:$0x1] %vm369, 0.0
      %388 = vst.msk [vmem:[#allocation2 + $0x11] sm:$0x1] %vm369, 0.0
      %389 = vst.msk [vmem:[#allocation2 + $0x29] sm:$0x1] %vm369, 0.0
      %390 = vst.msk [vmem:[#allocation2 + $0x41] sm:$0x1] %vm369, 0.0
      %391 = vst.msk [vmem:[#allocation2 + $0x59] sm:$0x1] %vm369, 0.0
      %392 = vst.msk [vmem:[#allocation2 + $0x71] sm:$0x1] %vm369, 0.0
      %393 = vst.msk [vmem:[#allocation2 + $0x89] sm:$0x1] %vm369, 0.0
      %394 = vst.msk [vmem:[#allocation2 + $0xa1] sm:$0x1] %vm369, 0.0
      %395 = vst.msk [vmem:[#allocation2 + $0xb9] sm:$0x1] %vm369, 0.0
      %396 = vst.msk [vmem:[#allocation2 + $0xd1] sm:$0x1] %vm369, 0.0
      %397 = vst.msk [vmem:[#allocation2 + $0xe9] sm:$0x1] %vm369, 0.0
      %398 = vst.msk [vmem:[#allocation2 + $0x101] sm:$0x1] %vm369, 0.0
      %399 = vst.msk [vmem:[#allocation2 + $0x119] sm:$0x1] %vm369, 0.0
      %400 = vst.msk [vmem:[#allocation2 + $0x131] sm:$0x1] %vm369, 0.0
      %401 = vst.msk [vmem:[#allocation2 + $0x149] sm:$0x1] %vm369, 0.0
      %402 = vst.msk [vmem:[#allocation2 + $0x161] sm:$0x1] %vm369, 0.0
      %403 = vst.msk [vmem:[#allocation2 + $0x179] sm:$0x1] %vm369, 0.0
      %404 = vst.msk [vmem:[#allocation2 + $0x191] sm:$0x1] %vm369, 0.0
      %405 = vst.msk [vmem:[#allocation2 + $0x1a9] sm:$0x1] %vm369, 0.0
      %v406 = vld [vmem:[%s354] sm:$0xff]
      %v407 = vld [vmem:[%s354 + $0x8] sm:$0xff]
      %v408 = vld [vmem:[%s354 + $0x10] sm:$0xff]
      %v409 = vld [vmem:[%s354 + $0x18] sm:$0xff]
      %v410 = vld [vmem:[%s354 + $0x20] sm:$0xff]
      %v411 = vld [vmem:[%s354 + $0x28] sm:$0xff]
      %v412 = vld [vmem:[%s354 + $0x30] sm:$0xff]
      %v413 = vld [vmem:[%s354 + $0x38] sm:$0xff]
      %v414 = vld [vmem:[%s354 + $0x40] sm:$0xff]
      %v415 = vld [vmem:[%s354 + $0x48] sm:$0xff]
      %v416 = vld [vmem:[%s354 + $0x50] sm:$0xff]
      %v417 = vld [vmem:[%s354 + $0x58] sm:$0xff]
      %v418 = vld [vmem:[%s354 + $0x60] sm:$0xff]
      %v419 = vld [vmem:[%s354 + $0x68] sm:$0xff]
      %v420 = vld [vmem:[%s354 + $0x70] sm:$0xff]
      %v421 = vld [vmem:[%s354 + $0x78] sm:$0xff]
      %v422 = vld [vmem:[%s354 + $0x80] sm:$0xff]
      %v423 = vld [vmem:[%s354 + $0x88] sm:$0xff]
      %v424 = vld [vmem:[%s354 + $0x90] sm:$0xff]
      %v425 = vld [vmem:[%s354 + $0x98] sm:$0xff]
      %v426 = vld [vmem:[%s354 + $0xa0] sm:$0xff]
      %v427 = vld [vmem:[%s354 + $0xa8] sm:$0xff]
      %v428 = vld [vmem:[%s354 + $0xb0] sm:$0xff]
      %v429 = vld [vmem:[%s354 + $0xb8] sm:$0xff]
      %v430 = vld [vmem:[%s354 + $0xc0] sm:$0xff]
      %v431 = vld [vmem:[%s354 + $0xc8] sm:$0xff]
      %v432 = vld [vmem:[%s354 + $0xd0] sm:$0xff]
      %v433 = vld [vmem:[%s354 + $0xd8] sm:$0xff]
      %v434 = vld [vmem:[%s354 + $0xe0] sm:$0xff]
      %v435 = vld [vmem:[%s354 + $0xe8] sm:$0xff]
      %v436 = vld [vmem:[%s354 + $0xf0] sm:$0xff]
      %v437 = vld [vmem:[%s354 + $0xf8] sm:$0xff]
      %v438 = vld [vmem:[%s1] sm:$0xff]
      %vm439 = vcmask 64512
      %v441 = vsel %vm439, %v406, 0
      %v444 = vsel %vm439, %v407, 0
      %v447 = vsel %vm439, %v408, 0
      %v450 = vsel %vm439, %v409, 0
      %v453 = vsel %vm439, %v410, 0
      %v456 = vsel %vm439, %v411, 0
      %v459 = vsel %vm439, %v412, 0
      %v462 = vsel %vm439, %v413, 0
      %v465 = vsel %vm439, %v414, 0
      %v468 = vsel %vm439, %v415, 0
      %v471 = vsel %vm439, %v416, 0
      %v474 = vsel %vm439, %v417, 0
      %v477 = vsel %vm439, %v418, 0
      %v480 = vsel %vm439, %v419, 0
      %v483 = vsel %vm439, %v420, 0
      %v486 = vsel %vm439, %v421, 0
      %v489 = vsel %vm439, %v422, 0
      %v492 = vsel %vm439, %v423, 0
      %v495 = vsel %vm439, %v424, 0
      %v498 = vsel %vm439, %v425, 0
      %v501 = vsel %vm439, %v426, 0
      %v504 = vsel %vm439, %v427, 0
      %v507 = vsel %vm439, %v428, 0
      %v510 = vsel %vm439, %v429, 0
      %v513 = vsel %vm439, %v430, 0
      %v516 = vsel %vm439, %v431, 0
      %v519 = vsel %vm439, %v432, 0
      %v522 = vsel %vm439, %v433, 0
      %v525 = vsel %vm439, %v434, 0
      %v528 = vsel %vm439, %v435, 0
      %v531 = vsel %vm439, %v436, 0
      %v534 = vsel %vm439, %v437, 0
      %536 = vmatprep.subr.mxu0 0.0
      %537 = vmatpush1.msra.mxu0 0.0
      %538 = vmatprep.subr.mxu0 0.0
      %539 = vmatpush1.msra.mxu0 0.0
      %540 = vmatprep.subr.mxu0 0.0
      %541 = vmatpush1.msra.mxu0 0.0
      %542 = vmatprep.subr.mxu0 0.0
      %543 = vmatpush1.msra.mxu0 0.0
      %544 = vmatprep.subr.mxu0 0.0
      %545 = vmatpush1.msra.mxu0 0.0
      %546 = vmatprep.subr.mxu0 0.0
      %547 = vmatpush1.msra.mxu0 0.0
      %548 = vmatprep.subr.mxu0 0.0
      %549 = vmatpush1.msra.mxu0 0.0
      %550 = vmatprep.subr.mxu0 0.0
      %551 = vmatpush1.msra.mxu0 0.0
      %552 = vmatprep.subr.mxu0 0.0
      %553 = vmatpush1.msra.mxu0 0.0
      %554 = vmatprep.subr.mxu0 0.0
      %555 = vmatpush1.msra.mxu0 0.0
      %556 = vmatprep.subr.mxu0 0.0
      %557 = vmatpush1.msra.mxu0 0.0
      %558 = vmatprep.subr.mxu0 0.0
      %559 = vmatpush1.msra.mxu0 0.0
      %560 = vmatprep.subr.mxu0 0.0
      %561 = vmatpush1.msra.mxu0 0.0
      %562 = vmatprep.subr.mxu0 0.0
      %563 = vmatpush1.msra.mxu0 0.0
      %564 = vmatprep.subr.mxu0 0.0
      %565 = vmatpush1.msra.mxu0 0.0
      %566 = vmatprep.subr.mxu0 0.0
      %567 = vmatpush1.msra.mxu0 %v438
      %568 = vmatprep.subr.mxu0 0.0
      %569 = vmatpush2.msra.mxu0 0.0
      %570 = vmatprep.subr.mxu0 0.0
      %571 = vmatpush2.msra.mxu0 0.0
      %572 = vmatprep.subr.mxu0 0.0
      %573 = vmatpush2.msra.mxu0 0.0
      %574 = vmatprep.subr.mxu0 0.0
      %575 = vmatpush2.msra.mxu0 0.0
      %576 = vmatprep.subr.mxu0 0.0
      %577 = vmatpush2.msra.mxu0 0.0
      %578 = vmatprep.subr.mxu0 0.0
      %579 = vmatpush2.msra.mxu0 0.0
      %580 = vmatprep.subr.mxu0 0.0
      %581 = vmatpush2.msra.mxu0 0.0
      %582 = vmatprep.subr.mxu0 0.0
      %583 = vmatpush2.msra.mxu0 0.0
      %584 = vmatprep.subr.mxu0 0.0
      %585 = vmatpush2.msra.mxu0 0.0
      %586 = vmatprep.subr.mxu0 0.0
      %587 = vmatpush2.msra.mxu0 0.0
      %588 = vmatprep.subr.mxu0 0.0
      %589 = vmatpush2.msra.mxu0 0.0
      %590 = vmatprep.subr.mxu0 0.0
      %591 = vmatpush2.msra.mxu0 0.0
      %592 = vmatprep.subr.mxu0 0.0
      %593 = vmatpush2.msra.mxu0 0.0
      %594 = vmatprep.subr.mxu0 0.0
      %595 = vmatpush2.msra.mxu0 0.0
      %596 = vmatprep.subr.mxu0 0.0
      %597 = vmatpush2.msra.mxu0 0.0
      %598 = vmatprep.subr.mxu0 0.0
      %599 = vmatpush2.msra.mxu0 0.0
      %600 = vmatprep.mubr.f32.mxu0 0.0
      %601 = vmatmul.mubr.f32.gmra.mxu0 %v441
      %v602 = vpop.f32.mrf.mxu0
      %v603 = vadd.f32 0.0, %v602
      %v604 = vpop.f32.mrf.mxu0
      %605 = vmatprep.mubr.f32.mxu0 0.0
      %606 = vmatmul.mubr.f32.gmra.mxu0 %v444
      %v607 = vpop.f32.mrf.mxu0
      %v608 = vadd.f32 0.0, %v607
      %v609 = vpop.f32.mrf.mxu0
      %610 = vmatprep.mubr.f32.mxu0 0.0
      %611 = vmatmul.mubr.f32.gmra.mxu0 %v447
      %v612 = vpop.f32.mrf.mxu0
      %v613 = vadd.f32 0.0, %v612
      %v614 = vpop.f32.mrf.mxu0
      %615 = vmatprep.mubr.f32.mxu0 0.0
      %616 = vmatmul.mubr.f32.gmra.mxu0 %v450
      %v617 = vpop.f32.mrf.mxu0
      %v618 = vadd.f32 0.0, %v617
      %v619 = vpop.f32.mrf.mxu0
      %620 = vmatprep.mubr.f32.mxu0 0.0
      %621 = vmatmul.mubr.f32.gmra.mxu0 %v453
      %v622 = vpop.f32.mrf.mxu0
      %v623 = vadd.f32 0.0, %v622
      %v624 = vpop.f32.mrf.mxu0
      %625 = vmatprep.mubr.f32.mxu0 0.0
      %626 = vmatmul.mubr.f32.gmra.mxu0 %v456
      %v627 = vpop.f32.mrf.mxu0
      %v628 = vadd.f32 0.0, %v627
      %v629 = vpop.f32.mrf.mxu0
      %630 = vmatprep.mubr.f32.mxu0 0.0
      %631 = vmatmul.mubr.f32.gmra.mxu0 %v459
      %v632 = vpop.f32.mrf.mxu0
      %v633 = vadd.f32 0.0, %v632
      %v634 = vpop.f32.mrf.mxu0
      %635 = vmatprep.mubr.f32.mxu0 0.0
      %636 = vmatmul.mubr.f32.gmra.mxu0 %v462
      %v637 = vpop.f32.mrf.mxu0
      %v638 = vadd.f32 0.0, %v637
      %v639 = vpop.f32.mrf.mxu0
      %640 = vmatprep.mubr.f32.mxu0 0.0
      %641 = vmatmul.mubr.f32.gmra.mxu0 %v465
      %v642 = vpop.f32.mrf.mxu0
      %v643 = vadd.f32 0.0, %v642
      %v644 = vpop.f32.mrf.mxu0
      %645 = vmatprep.mubr.f32.mxu0 0.0
      %646 = vmatmul.mubr.f32.gmra.mxu0 %v468
      %v647 = vpop.f32.mrf.mxu0
      %v648 = vadd.f32 0.0, %v647
      %v649 = vpop.f32.mrf.mxu0
      %650 = vmatprep.mubr.f32.mxu0 0.0
      %651 = vmatmul.mubr.f32.gmra.mxu0 %v471
      %v652 = vpop.f32.mrf.mxu0
      %v653 = vadd.f32 0.0, %v652
      %v654 = vpop.f32.mrf.mxu0
      %655 = vmatprep.mubr.f32.mxu0 0.0
      %656 = vmatmul.mubr.f32.gmra.mxu0 %v474
      %v657 = vpop.f32.mrf.mxu0
      %v658 = vadd.f32 0.0, %v657
      %v659 = vpop.f32.mrf.mxu0
      %660 = vmatprep.mubr.f32.mxu0 0.0
      %661 = vmatmul.mubr.f32.gmra.mxu0 %v477
      %v662 = vpop.f32.mrf.mxu0
      %v663 = vadd.f32 0.0, %v662
      %v664 = vpop.f32.mrf.mxu0
      %665 = vmatprep.mubr.f32.mxu0 0.0
      %666 = vmatmul.mubr.f32.gmra.mxu0 %v480
      %v667 = vpop.f32.mrf.mxu0
      %v668 = vadd.f32 0.0, %v667
      %v669 = vpop.f32.mrf.mxu0
      %670 = vmatprep.mubr.f32.mxu0 0.0
      %671 = vmatmul.mubr.f32.gmra.mxu0 %v483
      %v672 = vpop.f32.mrf.mxu0
      %v673 = vadd.f32 0.0, %v672
      %v674 = vpop.f32.mrf.mxu0
      %675 = vmatprep.mubr.f32.mxu0 0.0
      %676 = vmatmul.mubr.f32.gmra.mxu0 %v486
      %v677 = vpop.f32.mrf.mxu0
      %v678 = vadd.f32 0.0, %v677
      %v679 = vpop.f32.mrf.mxu0
      %680 = vmatprep.mubr.f32.mxu0 0.0
      %681 = vmatmul.mubr.f32.gmra.mxu0 %v489
      %v682 = vpop.f32.mrf.mxu0
      %v683 = vadd.f32 0.0, %v682
      %v684 = vpop.f32.mrf.mxu0
      %685 = vmatprep.mubr.f32.mxu0 0.0
      %686 = vmatmul.mubr.f32.gmra.mxu0 %v492
      %v687 = vpop.f32.mrf.mxu0
      %v688 = vadd.f32 0.0, %v687
      %v689 = vpop.f32.mrf.mxu0
      %690 = vmatprep.mubr.f32.mxu0 0.0
      %691 = vmatmul.mubr.f32.gmra.mxu0 %v495
      %v692 = vpop.f32.mrf.mxu0
      %v693 = vadd.f32 0.0, %v692
      %v694 = vpop.f32.mrf.mxu0
      %695 = vmatprep.mubr.f32.mxu0 0.0
      %696 = vmatmul.mubr.f32.gmra.mxu0 %v498
      %v697 = vpop.f32.mrf.mxu0
      %v698 = vadd.f32 0.0, %v697
      %v699 = vpop.f32.mrf.mxu0
      %700 = vmatprep.mubr.f32.mxu0 0.0
      %701 = vmatmul.mubr.f32.gmra.mxu0 %v501
      %v702 = vpop.f32.mrf.mxu0
      %v703 = vadd.f32 0.0, %v702
      %v704 = vpop.f32.mrf.mxu0
      %705 = vmatprep.mubr.f32.mxu0 0.0
      %706 = vmatmul.mubr.f32.gmra.mxu0 %v504
      %v707 = vpop.f32.mrf.mxu0
      %v708 = vadd.f32 0.0, %v707
      %v709 = vpop.f32.mrf.mxu0
      %710 = vmatprep.mubr.f32.mxu0 0.0
      %711 = vmatmul.mubr.f32.gmra.mxu0 %v507
      %v712 = vpop.f32.mrf.mxu0
      %v713 = vadd.f32 0.0, %v712
      %v714 = vpop.f32.mrf.mxu0
      %715 = vmatprep.mubr.f32.mxu0 0.0
      %716 = vmatmul.mubr.f32.gmra.mxu0 %v510
      %v717 = vpop.f32.mrf.mxu0
      %v718 = vadd.f32 0.0, %v717
      %v719 = vpop.f32.mrf.mxu0
      %720 = vmatprep.mubr.f32.mxu0 0.0
      %721 = vmatmul.mubr.f32.gmra.mxu0 %v513
      %v722 = vpop.f32.mrf.mxu0
      %v723 = vadd.f32 0.0, %v722
      %v724 = vpop.f32.mrf.mxu0
      %725 = vmatprep.mubr.f32.mxu0 0.0
      %726 = vmatmul.mubr.f32.gmra.mxu0 %v516
      %v727 = vpop.f32.mrf.mxu0
      %v728 = vadd.f32 0.0, %v727
      %v729 = vpop.f32.mrf.mxu0
      %730 = vmatprep.mubr.f32.mxu0 0.0
      %731 = vmatmul.mubr.f32.gmra.mxu0 %v519
      %v732 = vpop.f32.mrf.mxu0
      %v733 = vadd.f32 0.0, %v732
      %v734 = vpop.f32.mrf.mxu0
      %735 = vmatprep.mubr.f32.mxu0 0.0
      %736 = vmatmul.mubr.f32.gmra.mxu0 %v522
      %v737 = vpop.f32.mrf.mxu0
      %v738 = vadd.f32 0.0, %v737
      %v739 = vpop.f32.mrf.mxu0
      %740 = vmatprep.mubr.f32.mxu0 0.0
      %741 = vmatmul.mubr.f32.gmra.mxu0 %v525
      %v742 = vpop.f32.mrf.mxu0
      %v743 = vadd.f32 0.0, %v742
      %v744 = vpop.f32.mrf.mxu0
      %745 = vmatprep.mubr.f32.mxu0 0.0
      %746 = vmatmul.mubr.f32.gmra.mxu0 %v528
      %v747 = vpop.f32.mrf.mxu0
      %v748 = vadd.f32 0.0, %v747
      %v749 = vpop.f32.mrf.mxu0
      %750 = vmatprep.mubr.f32.mxu0 0.0
      %751 = vmatmul.mubr.f32.gmra.mxu0 %v531
      %v752 = vpop.f32.mrf.mxu0
      %v753 = vadd.f32 0.0, %v752
      %v754 = vpop.f32.mrf.mxu0
      %755 = vmatprep.mubr.f32.mxu0 0.0
      %756 = vmatmul.mubr.f32.gmra.mxu0 %v534
      %v757 = vpop.f32.mrf.mxu0
      %v758 = vadd.f32 0.0, %v757
      %v759 = vpop.f32.mrf.mxu0
      %760 = vdwg.mxu0
      %v761 = vld [vmem:[%s2] sm:$0x1]
      %v763 = vlaneseq
      %v764 = vshrl.u32 %v763, 7
      %v765 = vsub.s32 0, %v764
      %v766 = vrot.slane %v761, %v765
      %v768 = vmul.f32 %v603, %v766
      %v769 = vmul.f32 %v608, %v766
      %v770 = vmul.f32 %v613, %v766
      %v771 = vmul.f32 %v618, %v766
      %v772 = vmul.f32 %v623, %v766
      %v773 = vmul.f32 %v628, %v766
      %v774 = vmul.f32 %v633, %v766
      %v775 = vmul.f32 %v638, %v766
      %v776 = vmul.f32 %v643, %v766
      %v777 = vmul.f32 %v648, %v766
      %v778 = vmul.f32 %v653, %v766
      %v779 = vmul.f32 %v658, %v766
      %v780 = vmul.f32 %v663, %v766
      %v781 = vmul.f32 %v668, %v766
      %v782 = vmul.f32 %v673, %v766
      %v783 = vmul.f32 %v678, %v766
      %v784 = vmul.f32 %v683, %v766
      %v785 = vmul.f32 %v688, %v766
      %v786 = vmul.f32 %v693, %v766
      %v787 = vmul.f32 %v698, %v766
      %v788 = vmul.f32 %v703, %v766
      %v789 = vmul.f32 %v708, %v766
      %v790 = vmul.f32 %v713, %v766
      %v791 = vmul.f32 %v718, %v766
      %v792 = vmul.f32 %v723, %v766
      %v793 = vmul.f32 %v728, %v766
      %v794 = vmul.f32 %v733, %v766
      %v795 = vmul.f32 %v738, %v766
      %v796 = vmul.f32 %v743, %v766
      %v797 = vmul.f32 %v748, %v766
      %v798 = vmul.f32 %v753, %v766
      %v799 = vmul.f32 %v758, %v766
      %v800 = vld [vmem:[%s3] sm:$0x1]
      %v802 = vlaneseq
      %v803 = vshrl.u32 %v802, 7
      %v804 = vsub.s32 0, %v803
      %v805 = vrot.slane %v800, %v804
      %v807 = vadd.f32 %v768, %v805
      %v808 = vadd.f32 %v769, %v805
      %v809 = vadd.f32 %v770, %v805
      %v810 = vadd.f32 %v771, %v805
      %v811 = vadd.f32 %v772, %v805
      %v812 = vadd.f32 %v773, %v805
      %v813 = vadd.f32 %v774, %v805
      %v814 = vadd.f32 %v775, %v805
      %v815 = vadd.f32 %v776, %v805
      %v816 = vadd.f32 %v777, %v805
      %v817 = vadd.f32 %v778, %v805
      %v818 = vadd.f32 %v779, %v805
      %v819 = vadd.f32 %v780, %v805
      %v820 = vadd.f32 %v781, %v805
      %v821 = vadd.f32 %v782, %v805
      %v822 = vadd.f32 %v783, %v805
      %v823 = vadd.f32 %v784, %v805
      %v824 = vadd.f32 %v785, %v805
      %v825 = vadd.f32 %v786, %v805
      %v826 = vadd.f32 %v787, %v805
      %v827 = vadd.f32 %v788, %v805
      %v828 = vadd.f32 %v789, %v805
      %v829 = vadd.f32 %v790, %v805
      %v830 = vadd.f32 %v791, %v805
      %v831 = vadd.f32 %v792, %v805
      %v832 = vadd.f32 %v793, %v805
      %v833 = vadd.f32 %v794, %v805
      %v834 = vadd.f32 %v795, %v805
      %v835 = vadd.f32 %v796, %v805
      %v836 = vadd.f32 %v797, %v805
      %v837 = vadd.f32 %v798, %v805
      %v838 = vadd.f32 %v799, %v805
      %v839 = vmax.f32 %v807, 0.0
      %v840 = vmax.f32 %v808, 0.0
      %v841 = vmax.f32 %v809, 0.0
      %v842 = vmax.f32 %v810, 0.0
      %v843 = vmax.f32 %v811, 0.0
      %v844 = vmax.f32 %v812, 0.0
      %v845 = vmax.f32 %v813, 0.0
      %v846 = vmax.f32 %v814, 0.0
      %v847 = vmax.f32 %v815, 0.0
      %v848 = vmax.f32 %v816, 0.0
      %v849 = vmax.f32 %v817, 0.0
      %v850 = vmax.f32 %v818, 0.0
      %v851 = vmax.f32 %v819, 0.0
      %v852 = vmax.f32 %v820, 0.0
      %v853 = vmax.f32 %v821, 0.0
      %v854 = vmax.f32 %v822, 0.0
      %v855 = vmax.f32 %v823, 0.0
      %v856 = vmax.f32 %v824, 0.0
      %v857 = vmax.f32 %v825, 0.0
      %v858 = vmax.f32 %v826, 0.0
      %v859 = vmax.f32 %v827, 0.0
      %v860 = vmax.f32 %v828, 0.0
      %v861 = vmax.f32 %v829, 0.0
      %v862 = vmax.f32 %v830, 0.0
      %v863 = vmax.f32 %v831, 0.0
      %v864 = vmax.f32 %v832, 0.0
      %v865 = vmax.f32 %v833, 0.0
      %v866 = vmax.f32 %v834, 0.0
      %v867 = vmax.f32 %v835, 0.0
      %v868 = vmax.f32 %v836, 0.0
      %v869 = vmax.f32 %v837, 0.0
      %v870 = vmax.f32 %v838, 0.0
      %v871 = vmin.f32 %v839, 6.0
      %v872 = vmin.f32 %v840, 6.0
      %v873 = vmin.f32 %v841, 6.0
      %v874 = vmin.f32 %v842, 6.0
      %v875 = vmin.f32 %v843, 6.0
      %v876 = vmin.f32 %v844, 6.0
      %v877 = vmin.f32 %v845, 6.0
      %v878 = vmin.f32 %v846, 6.0
      %v879 = vmin.f32 %v847, 6.0
      %v880 = vmin.f32 %v848, 6.0
      %v881 = vmin.f32 %v849, 6.0
      %v882 = vmin.f32 %v850, 6.0
      %v883 = vmin.f32 %v851, 6.0
      %v884 = vmin.f32 %v852, 6.0
      %v885 = vmin.f32 %v853, 6.0
      %v886 = vmin.f32 %v854, 6.0
      %v887 = vmin.f32 %v855, 6.0
      %v888 = vmin.f32 %v856, 6.0
      %v889 = vmin.f32 %v857, 6.0
      %v890 = vmin.f32 %v858, 6.0
      %v891 = vmin.f32 %v859, 6.0
      %v892 = vmin.f32 %v860, 6.0
      %v893 = vmin.f32 %v861, 6.0
      %v894 = vmin.f32 %v862, 6.0
      %v895 = vmin.f32 %v863, 6.0
      %v896 = vmin.f32 %v864, 6.0
      %v897 = vmin.f32 %v865, 6.0
      %v898 = vmin.f32 %v866, 6.0
      %v899 = vmin.f32 %v867, 6.0
      %v900 = vmin.f32 %v868, 6.0
      %v901 = vmin.f32 %v869, 6.0
      %v902 = vmin.f32 %v870, 6.0
      %s903 = scalar_lea.vmem [#allocation2], 24
      %904 = vst.msk [vmem:[%s903 + $0x1] sm:$0xff] %vm360, %v871
      %905 = vst.msk [vmem:[%s903 + $0x9] sm:$0xff] %vm360, %v872
      %906 = vst.msk [vmem:[%s903 + $0x19] sm:$0xff] %vm360, %v873
      %907 = vst.msk [vmem:[%s903 + $0x21] sm:$0xff] %vm360, %v874
      %908 = vst.msk [vmem:[%s903 + $0x31] sm:$0xff] %vm360, %v875
      %909 = vst.msk [vmem:[%s903 + $0x39] sm:$0xff] %vm360, %v876
      %910 = vst.msk [vmem:[%s903 + $0x49] sm:$0xff] %vm360, %v877
      %911 = vst.msk [vmem:[%s903 + $0x51] sm:$0xff] %vm360, %v878
      %912 = vst.msk [vmem:[%s903 + $0x61] sm:$0xff] %vm360, %v879
      %913 = vst.msk [vmem:[%s903 + $0x69] sm:$0xff] %vm360, %v880
      %914 = vst.msk [vmem:[%s903 + $0x79] sm:$0xff] %vm360, %v881
      %915 = vst.msk [vmem:[%s903 + $0x81] sm:$0xff] %vm360, %v882
      %916 = vst.msk [vmem:[%s903 + $0x91] sm:$0xff] %vm360, %v883
      %917 = vst.msk [vmem:[%s903 + $0x99] sm:$0xff] %vm360, %v884
      %918 = vst.msk [vmem:[%s903 + $0xa9] sm:$0xff] %vm360, %v885
      %919 = vst.msk [vmem:[%s903 + $0xb1] sm:$0xff] %vm360, %v886
      %920 = vst.msk [vmem:[%s903 + $0xc1] sm:$0xff] %vm360, %v887
      %921 = vst.msk [vmem:[%s903 + $0xc9] sm:$0xff] %vm360, %v888
      %922 = vst.msk [vmem:[%s903 + $0xd9] sm:$0xff] %vm360, %v889
      %923 = vst.msk [vmem:[%s903 + $0xe1] sm:$0xff] %vm360, %v890
      %924 = vst.msk [vmem:[%s903 + $0xf1] sm:$0xff] %vm360, %v891
      %925 = vst.msk [vmem:[%s903 + $0xf9] sm:$0xff] %vm360, %v892
      %926 = vst.msk [vmem:[%s903 + $0x109] sm:$0xff] %vm360, %v893
      %927 = vst.msk [vmem:[%s903 + $0x111] sm:$0xff] %vm360, %v894
      %928 = vst.msk [vmem:[%s903 + $0x121] sm:$0xff] %vm360, %v895
      %929 = vst.msk [vmem:[%s903 + $0x129] sm:$0xff] %vm360, %v896
      %930 = vst.msk [vmem:[%s903 + $0x139] sm:$0xff] %vm360, %v897
      %931 = vst.msk [vmem:[%s903 + $0x141] sm:$0xff] %vm360, %v898
      %932 = vst.msk [vmem:[%s903 + $0x151] sm:$0xff] %vm360, %v899
      %933 = vst.msk [vmem:[%s903 + $0x159] sm:$0xff] %vm360, %v900
      %934 = vst.msk [vmem:[%s903 + $0x169] sm:$0xff] %vm360, %v901
      %935 = vst.msk [vmem:[%s903 + $0x171] sm:$0xff] %vm360, %v902
      %v936 = vld [vmem:[%s4] sm:$0xff]
      %v937 = vld [vmem:[%s4 + $0x8] sm:$0x1]
      %v938 = vld [vmem:[#allocation2] sm:$0xff]
      %v939 = vld [vmem:[#allocation2 + $0x8] sm:$0xff]
      %v940 = vld [vmem:[#allocation2 + $0x18] sm:$0xff]
      %v941 = vld [vmem:[#allocation2 + $0x20] sm:$0xff]
      %v942 = vld [vmem:[#allocation2 + $0x30] sm:$0xff]
      %v943 = vld [vmem:[#allocation2 + $0x38] sm:$0xff]
      %v944 = vld [vmem:[#allocation2 + $0x48] sm:$0xff]
      %v945 = vld [vmem:[#allocation2 + $0x50] sm:$0xff]
      %v946 = vld [vmem:[#allocation2 + $0x60] sm:$0xff]
      %v947 = vld [vmem:[#allocation2 + $0x68] sm:$0xff]
      %v948 = vld [vmem:[#allocation2 + $0x78] sm:$0xff]
      %v949 = vld [vmem:[#allocation2 + $0x80] sm:$0xff]
      %v950 = vld [vmem:[#allocation2 + $0x90] sm:$0xff]
      %v951 = vld [vmem:[#allocation2 + $0x98] sm:$0xff]
      %v952 = vld [vmem:[#allocation2 + $0xa8] sm:$0xff]
      %v953 = vld [vmem:[#allocation2 + $0xb0] sm:$0xff]
      %v954 = vld [vmem:[#allocation2 + $0xc0] sm:$0xff]
      %v955 = vld [vmem:[#allocation2 + $0xc8] sm:$0xff]
      %v956 = vld [vmem:[#allocation2 + $0xd8] sm:$0xff]
      %v957 = vld [vmem:[#allocation2 + $0xe0] sm:$0xff]
      %v958 = vld [vmem:[#allocation2 + $0xf0] sm:$0xff]
      %v959 = vld [vmem:[#allocation2 + $0xf8] sm:$0xff]
      %v960 = vld [vmem:[#allocation2 + $0x108] sm:$0xff]
      %v961 = vld [vmem:[#allocation2 + $0x110] sm:$0xff]
      %v962 = vld [vmem:[#allocation2 + $0x120] sm:$0xff]
      %v963 = vld [vmem:[#allocation2 + $0x128] sm:$0xff]
      %v964 = vld [vmem:[#allocation2 + $0x138] sm:$0xff]
      %v965 = vld [vmem:[#allocation2 + $0x140] sm:$0xff]
      %v966 = vld [vmem:[#allocation2 + $0x150] sm:$0xff]
      %v967 = vld [vmem:[#allocation2 + $0x158] sm:$0xff]
      %v968 = vld [vmem:[#allocation2 + $0x168] sm:$0xff]
      %v969 = vld [vmem:[#allocation2 + $0x170] sm:$0xff]
      %v970 = vlaneseq
      %v971 = vshrl.u32 %v970, 7
      %v972 = vsub.s32 0, %v971
      %v973 = vrot.slane %v936, %v972
      %v974 = vmul.f32 %v938, %v973
      %v975 = vmul.f32 %v939, %v973
      %v976 = vmul.f32 %v940, %v973
      %v977 = vmul.f32 %v941, %v973
      %v978 = vmul.f32 %v942, %v973
      %v979 = vmul.f32 %v943, %v973
      %v980 = vmul.f32 %v944, %v973
      %v981 = vmul.f32 %v945, %v973
      %v982 = vmul.f32 %v946, %v973
      %v983 = vmul.f32 %v947, %v973
      %v984 = vmul.f32 %v948, %v973
      %v985 = vmul.f32 %v949, %v973
      %v986 = vmul.f32 %v950, %v973
      %v987 = vmul.f32 %v951, %v973
      %v988 = vmul.f32 %v952, %v973
      %v989 = vmul.f32 %v953, %v973
      %v990 = vmul.f32 %v954, %v973
      %v991 = vmul.f32 %v955, %v973
      %v992 = vmul.f32 %v956, %v973
      %v993 = vmul.f32 %v957, %v973
      %v994 = vmul.f32 %v958, %v973
      %v995 = vmul.f32 %v959, %v973
      %v996 = vmul.f32 %v960, %v973
      %v997 = vmul.f32 %v961, %v973
      %v998 = vmul.f32 %v962, %v973
      %v999 = vmul.f32 %v963, %v973
      %v1000 = vmul.f32 %v964, %v973
      %v1001 = vmul.f32 %v965, %v973
      %v1002 = vmul.f32 %v966, %v973
      %v1003 = vmul.f32 %v967, %v973
      %v1004 = vmul.f32 %v968, %v973
      %v1005 = vmul.f32 %v969, %v973
      %v1006 = vadd.f32 %v974, 0.0
      %v1007 = vadd.f32 %v975, 0.0
      %v1008 = vadd.f32 %v976, 0.0
      %v1009 = vadd.f32 %v977, 0.0
      %v1010 = vadd.f32 %v978, 0.0
      %v1011 = vadd.f32 %v979, 0.0
      %v1012 = vadd.f32 %v980, 0.0
      %v1013 = vadd.f32 %v981, 0.0
      %v1014 = vadd.f32 %v982, 0.0
      %v1015 = vadd.f32 %v983, 0.0
      %v1016 = vadd.f32 %v984, 0.0
      %v1017 = vadd.f32 %v985, 0.0
      %v1018 = vadd.f32 %v986, 0.0
      %v1019 = vadd.f32 %v987, 0.0
      %v1020 = vadd.f32 %v988, 0.0
      %v1021 = vadd.f32 %v989, 0.0
      %v1022 = vadd.f32 %v990, 0.0
      %v1023 = vadd.f32 %v991, 0.0
      %v1024 = vadd.f32 %v992, 0.0
      %v1025 = vadd.f32 %v993, 0.0
      %v1026 = vadd.f32 %v994, 0.0
      %v1027 = vadd.f32 %v995, 0.0
      %v1028 = vadd.f32 %v996, 0.0
      %v1029 = vadd.f32 %v997, 0.0
      %v1030 = vadd.f32 %v998, 0.0
      %v1031 = vadd.f32 %v999, 0.0
      %v1032 = vadd.f32 %v1000, 0.0
      %v1033 = vadd.f32 %v1001, 0.0
      %v1034 = vadd.f32 %v1002, 0.0
      %v1035 = vadd.f32 %v1003, 0.0
      %v1036 = vadd.f32 %v1004, 0.0
      %v1037 = vadd.f32 %v1005, 0.0
      %v1038 = vld [vmem:[#allocation2 + $0x1] sm:$0xff]
      %v1039 = vld [vmem:[#allocation2 + $0x9] sm:$0xff]
      %v1040 = vld [vmem:[#allocation2 + $0x19] sm:$0xff]
      %v1041 = vld [vmem:[#allocation2 + $0x21] sm:$0xff]
      %v1042 = vld [vmem:[#allocation2 + $0x31] sm:$0xff]
      %v1043 = vld [vmem:[#allocation2 + $0x39] sm:$0xff]
      %v1044 = vld [vmem:[#allocation2 + $0x49] sm:$0xff]
      %v1045 = vld [vmem:[#allocation2 + $0x51] sm:$0xff]
      %v1046 = vld [vmem:[#allocation2 + $0x61] sm:$0xff]
      %v1047 = vld [vmem:[#allocation2 + $0x69] sm:$0xff]
      %v1048 = vld [vmem:[#allocation2 + $0x79] sm:$0xff]
      %v1049 = vld [vmem:[#allocation2 + $0x81] sm:$0xff]
      %v1050 = vld [vmem:[#allocation2 + $0x91] sm:$0xff]
      %v1051 = vld [vmem:[#allocation2 + $0x99] sm:$0xff]
      %v1052 = vld [vmem:[#allocation2 + $0xa9] sm:$0xff]
      %v1053 = vld [vmem:[#allocation2 + $0xb1] sm:$0xff]
      %v1054 = vld [vmem:[#allocation2 + $0xc1] sm:$0xff]
      %v1055 = vld [vmem:[#allocation2 + $0xc9] sm:$0xff]
      %v1056 = vld [vmem:[#allocation2 + $0xd9] sm:$0xff]
      %v1057 = vld [vmem:[#allocation2 + $0xe1] sm:$0xff]
      %v1058 = vld [vmem:[#allocation2 + $0xf1] sm:$0xff]
      %v1059 = vld [vmem:[#allocation2 + $0xf9] sm:$0xff]
      %v1060 = vld [vmem:[#allocation2 + $0x109] sm:$0xff]
      %v1061 = vld [vmem:[#allocation2 + $0x111] sm:$0xff]
      %v1062 = vld [vmem:[#allocation2 + $0x121] sm:$0xff]
      %v1063 = vld [vmem:[#allocation2 + $0x129] sm:$0xff]
      %v1064 = vld [vmem:[#allocation2 + $0x139] sm:$0xff]
      %v1065 = vld [vmem:[#allocation2 + $0x141] sm:$0xff]
      %v1066 = vld [vmem:[#allocation2 + $0x151] sm:$0xff]
      %v1067 = vld [vmem:[#allocation2 + $0x159] sm:$0xff]
      %v1068 = vld [vmem:[#allocation2 + $0x169] sm:$0xff]
      %v1069 = vld [vmem:[#allocation2 + $0x171] sm:$0xff]
      %v1070 = vlaneseq
      %v1071 = vshrl.u32 %v1070, 7
      %v1072 = vsub.s32 1, %v1071
      %v1073 = vrot.slane %v936, %v1072
      %v1074 = vmul.f32 %v1038, %v1073
      %v1075 = vmul.f32 %v1039, %v1073
      %v1076 = vmul.f32 %v1040, %v1073
      %v1077 = vmul.f32 %v1041, %v1073
      %v1078 = vmul.f32 %v1042, %v1073
      %v1079 = vmul.f32 %v1043, %v1073
      %v1080 = vmul.f32 %v1044, %v1073
      %v1081 = vmul.f32 %v1045, %v1073
      %v1082 = vmul.f32 %v1046, %v1073
      %v1083 = vmul.f32 %v1047, %v1073
      %v1084 = vmul.f32 %v1048, %v1073
      %v1085 = vmul.f32 %v1049, %v1073
      %v1086 = vmul.f32 %v1050, %v1073
      %v1087 = vmul.f32 %v1051, %v1073
      %v1088 = vmul.f32 %v1052, %v1073
      %v1089 = vmul.f32 %v1053, %v1073
      %v1090 = vmul.f32 %v1054, %v1073
      %v1091 = vmul.f32 %v1055, %v1073
      %v1092 = vmul.f32 %v1056, %v1073
      %v1093 = vmul.f32 %v1057, %v1073
      %v1094 = vmul.f32 %v1058, %v1073
      %v1095 = vmul.f32 %v1059, %v1073
      %v1096 = vmul.f32 %v1060, %v1073
      %v1097 = vmul.f32 %v1061, %v1073
      %v1098 = vmul.f32 %v1062, %v1073
      %v1099 = vmul.f32 %v1063, %v1073
      %v1100 = vmul.f32 %v1064, %v1073
      %v1101 = vmul.f32 %v1065, %v1073
      %v1102 = vmul.f32 %v1066, %v1073
      %v1103 = vmul.f32 %v1067, %v1073
      %v1104 = vmul.f32 %v1068, %v1073
      %v1105 = vmul.f32 %v1069, %v1073
      %v1106 = vadd.f32 %v1006, %v1074
      %v1107 = vadd.f32 %v1007, %v1075
      %v1108 = vadd.f32 %v1008, %v1076
      %v1109 = vadd.f32 %v1009, %v1077
      %v1110 = vadd.f32 %v1010, %v1078
      %v1111 = vadd.f32 %v1011, %v1079
      %v1112 = vadd.f32 %v1012, %v1080
      %v1113 = vadd.f32 %v1013, %v1081
      %v1114 = vadd.f32 %v1014, %v1082
      %v1115 = vadd.f32 %v1015, %v1083
      %v1116 = vadd.f32 %v1016, %v1084
      %v1117 = vadd.f32 %v1017, %v1085
      %v1118 = vadd.f32 %v1018, %v1086
      %v1119 = vadd.f32 %v1019, %v1087
      %v1120 = vadd.f32 %v1020, %v1088
      %v1121 = vadd.f32 %v1021, %v1089
      %v1122 = vadd.f32 %v1022, %v1090
      %v1123 = vadd.f32 %v1023, %v1091
      %v1124 = vadd.f32 %v1024, %v1092
      %v1125 = vadd.f32 %v1025, %v1093
      %v1126 = vadd.f32 %v1026, %v1094
      %v1127 = vadd.f32 %v1027, %v1095
      %v1128 = vadd.f32 %v1028, %v1096
      %v1129 = vadd.f32 %v1029, %v1097
      %v1130 = vadd.f32 %v1030, %v1098
      %v1131 = vadd.f32 %v1031, %v1099
      %v1132 = vadd.f32 %v1032, %v1100
      %v1133 = vadd.f32 %v1033, %v1101
      %v1134 = vadd.f32 %v1034, %v1102
      %v1135 = vadd.f32 %v1035, %v1103
      %v1136 = vadd.f32 %v1036, %v1104
      %v1137 = vadd.f32 %v1037, %v1105
      %v1138 = vld [vmem:[#allocation2 + $0x2] sm:$0xff]
      %v1139 = vld [vmem:[#allocation2 + $0xa] sm:$0xff]
      %v1140 = vld [vmem:[#allocation2 + $0x1a] sm:$0xff]
      %v1141 = vld [vmem:[#allocation2 + $0x22] sm:$0xff]
      %v1142 = vld [vmem:[#allocation2 + $0x32] sm:$0xff]
      %v1143 = vld [vmem:[#allocation2 + $0x3a] sm:$0xff]
      %v1144 = vld [vmem:[#allocation2 + $0x4a] sm:$0xff]
      %v1145 = vld [vmem:[#allocation2 + $0x52] sm:$0xff]
      %v1146 = vld [vmem:[#allocation2 + $0x62] sm:$0xff]
      %v1147 = vld [vmem:[#allocation2 + $0x6a] sm:$0xff]
      %v1148 = vld [vmem:[#allocation2 + $0x7a] sm:$0xff]
      %v1149 = vld [vmem:[#allocation2 + $0x82] sm:$0xff]
      %v1150 = vld [vmem:[#allocation2 + $0x92] sm:$0xff]
      %v1151 = vld [vmem:[#allocation2 + $0x9a] sm:$0xff]
      %v1152 = vld [vmem:[#allocation2 + $0xaa] sm:$0xff]
      %v1153 = vld [vmem:[#allocation2 + $0xb2] sm:$0xff]
      %v1154 = vld [vmem:[#allocation2 + $0xc2] sm:$0xff]
      %v1155 = vld [vmem:[#allocation2 + $0xca] sm:$0xff]
      %v1156 = vld [vmem:[#allocation2 + $0xda] sm:$0xff]
      %v1157 = vld [vmem:[#allocation2 + $0xe2] sm:$0xff]
      %v1158 = vld [vmem:[#allocation2 + $0xf2] sm:$0xff]
      %v1159 = vld [vmem:[#allocation2 + $0xfa] sm:$0xff]
      %v1160 = vld [vmem:[#allocation2 + $0x10a] sm:$0xff]
      %v1161 = vld [vmem:[#allocation2 + $0x112] sm:$0xff]
      %v1162 = vld [vmem:[#allocation2 + $0x122] sm:$0xff]
      %v1163 = vld [vmem:[#allocation2 + $0x12a] sm:$0xff]
      %v1164 = vld [vmem:[#allocation2 + $0x13a] sm:$0xff]
      %v1165 = vld [vmem:[#allocation2 + $0x142] sm:$0xff]
      %v1166 = vld [vmem:[#allocation2 + $0x152] sm:$0xff]
      %v1167 = vld [vmem:[#allocation2 + $0x15a] sm:$0xff]
      %v1168 = vld [vmem:[#allocation2 + $0x16a] sm:$0xff]
      %v1169 = vld [vmem:[#allocation2 + $0x172] sm:$0xff]
      %v1170 = vlaneseq
      %v1171 = vshrl.u32 %v1170, 7
      %v1172 = vsub.s32 2, %v1171
      %v1173 = vrot.slane %v936, %v1172
      %v1174 = vmul.f32 %v1138, %v1173
      %v1175 = vmul.f32 %v1139, %v1173
      %v1176 = vmul.f32 %v1140, %v1173
      %v1177 = vmul.f32 %v1141, %v1173
      %v1178 = vmul.f32 %v1142, %v1173
      %v1179 = vmul.f32 %v1143, %v1173
      %v1180 = vmul.f32 %v1144, %v1173
      %v1181 = vmul.f32 %v1145, %v1173
      %v1182 = vmul.f32 %v1146, %v1173
      %v1183 = vmul.f32 %v1147, %v1173
      %v1184 = vmul.f32 %v1148, %v1173
      %v1185 = vmul.f32 %v1149, %v1173
      %v1186 = vmul.f32 %v1150, %v1173
      %v1187 = vmul.f32 %v1151, %v1173
      %v1188 = vmul.f32 %v1152, %v1173
      %v1189 = vmul.f32 %v1153, %v1173
      %v1190 = vmul.f32 %v1154, %v1173
      %v1191 = vmul.f32 %v1155, %v1173
      %v1192 = vmul.f32 %v1156, %v1173
      %v1193 = vmul.f32 %v1157, %v1173
      %v1194 = vmul.f32 %v1158, %v1173
      %v1195 = vmul.f32 %v1159, %v1173
      %v1196 = vmul.f32 %v1160, %v1173
      %v1197 = vmul.f32 %v1161, %v1173
      %v1198 = vmul.f32 %v1162, %v1173
      %v1199 = vmul.f32 %v1163, %v1173
      %v1200 = vmul.f32 %v1164, %v1173
      %v1201 = vmul.f32 %v1165, %v1173
      %v1202 = vmul.f32 %v1166, %v1173
      %v1203 = vmul.f32 %v1167, %v1173
      %v1204 = vmul.f32 %v1168, %v1173
      %v1205 = vmul.f32 %v1169, %v1173
      %v1206 = vadd.f32 %v1106, %v1174
      %v1207 = vadd.f32 %v1107, %v1175
      %v1208 = vadd.f32 %v1108, %v1176
      %v1209 = vadd.f32 %v1109, %v1177
      %v1210 = vadd.f32 %v1110, %v1178
      %v1211 = vadd.f32 %v1111, %v1179
      %v1212 = vadd.f32 %v1112, %v1180
      %v1213 = vadd.f32 %v1113, %v1181
      %v1214 = vadd.f32 %v1114, %v1182
      %v1215 = vadd.f32 %v1115, %v1183
      %v1216 = vadd.f32 %v1116, %v1184
      %v1217 = vadd.f32 %v1117, %v1185
      %v1218 = vadd.f32 %v1118, %v1186
      %v1219 = vadd.f32 %v1119, %v1187
      %v1220 = vadd.f32 %v1120, %v1188
      %v1221 = vadd.f32 %v1121, %v1189
      %v1222 = vadd.f32 %v1122, %v1190
      %v1223 = vadd.f32 %v1123, %v1191
      %v1224 = vadd.f32 %v1124, %v1192
      %v1225 = vadd.f32 %v1125, %v1193
      %v1226 = vadd.f32 %v1126, %v1194
      %v1227 = vadd.f32 %v1127, %v1195
      %v1228 = vadd.f32 %v1128, %v1196
      %v1229 = vadd.f32 %v1129, %v1197
      %v1230 = vadd.f32 %v1130, %v1198
      %v1231 = vadd.f32 %v1131, %v1199
      %v1232 = vadd.f32 %v1132, %v1200
      %v1233 = vadd.f32 %v1133, %v1201
      %v1234 = vadd.f32 %v1134, %v1202
      %v1235 = vadd.f32 %v1135, %v1203
      %v1236 = vadd.f32 %v1136, %v1204
      %v1237 = vadd.f32 %v1137, %v1205
      %v1238 = vld [vmem:[%s903] sm:$0xff]
      %v1239 = vld [vmem:[%s903 + $0x8] sm:$0xff]
      %v1240 = vld [vmem:[%s903 + $0x18] sm:$0xff]
      %v1241 = vld [vmem:[%s903 + $0x20] sm:$0xff]
      %v1242 = vld [vmem:[%s903 + $0x30] sm:$0xff]
      %v1243 = vld [vmem:[%s903 + $0x38] sm:$0xff]
      %v1244 = vld [vmem:[%s903 + $0x48] sm:$0xff]
      %v1245 = vld [vmem:[%s903 + $0x50] sm:$0xff]
      %v1246 = vld [vmem:[%s903 + $0x60] sm:$0xff]
      %v1247 = vld [vmem:[%s903 + $0x68] sm:$0xff]
      %v1248 = vld [vmem:[%s903 + $0x78] sm:$0xff]
      %v1249 = vld [vmem:[%s903 + $0x80] sm:$0xff]
      %v1250 = vld [vmem:[%s903 + $0x90] sm:$0xff]
      %v1251 = vld [vmem:[%s903 + $0x98] sm:$0xff]
      %v1252 = vld [vmem:[%s903 + $0xa8] sm:$0xff]
      %v1253 = vld [vmem:[%s903 + $0xb0] sm:$0xff]
      %v1254 = vld [vmem:[%s903 + $0xc0] sm:$0xff]
      %v1255 = vld [vmem:[%s903 + $0xc8] sm:$0xff]
      %v1256 = vld [vmem:[%s903 + $0xd8] sm:$0xff]
      %v1257 = vld [vmem:[%s903 + $0xe0] sm:$0xff]
      %v1258 = vld [vmem:[%s903 + $0xf0] sm:$0xff]
      %v1259 = vld [vmem:[%s903 + $0xf8] sm:$0xff]
      %v1260 = vld [vmem:[%s903 + $0x108] sm:$0xff]
      %v1261 = vld [vmem:[%s903 + $0x110] sm:$0xff]
      %v1262 = vld [vmem:[%s903 + $0x120] sm:$0xff]
      %v1263 = vld [vmem:[%s903 + $0x128] sm:$0xff]
      %v1264 = vld [vmem:[%s903 + $0x138] sm:$0xff]
      %v1265 = vld [vmem:[%s903 + $0x140] sm:$0xff]
      %v1266 = vld [vmem:[%s903 + $0x150] sm:$0xff]
      %v1267 = vld [vmem:[%s903 + $0x158] sm:$0xff]
      %v1268 = vld [vmem:[%s903 + $0x168] sm:$0xff]
      %v1269 = vld [vmem:[%s903 + $0x170] sm:$0xff]
      %v1270 = vlaneseq
      %v1271 = vshrl.u32 %v1270, 7
      %v1272 = vsub.s32 3, %v1271
      %v1273 = vrot.slane %v936, %v1272
      %v1274 = vmul.f32 %v1238, %v1273
      %v1275 = vmul.f32 %v1239, %v1273
      %v1276 = vmul.f32 %v1240, %v1273
      %v1277 = vmul.f32 %v1241, %v1273
      %v1278 = vmul.f32 %v1242, %v1273
      %v1279 = vmul.f32 %v1243, %v1273
      %v1280 = vmul.f32 %v1244, %v1273
      %v1281 = vmul.f32 %v1245, %v1273
      %v1282 = vmul.f32 %v1246, %v1273
      %v1283 = vmul.f32 %v1247, %v1273
      %v1284 = vmul.f32 %v1248, %v1273
      %v1285 = vmul.f32 %v1249, %v1273
      %v1286 = vmul.f32 %v1250, %v1273
      %v1287 = vmul.f32 %v1251, %v1273
      %v1288 = vmul.f32 %v1252, %v1273
      %v1289 = vmul.f32 %v1253, %v1273
      %v1290 = vmul.f32 %v1254, %v1273
      %v1291 = vmul.f32 %v1255, %v1273
      %v1292 = vmul.f32 %v1256, %v1273
      %v1293 = vmul.f32 %v1257, %v1273
      %v1294 = vmul.f32 %v1258, %v1273
      %v1295 = vmul.f32 %v1259, %v1273
      %v1296 = vmul.f32 %v1260, %v1273
      %v1297 = vmul.f32 %v1261, %v1273
      %v1298 = vmul.f32 %v1262, %v1273
      %v1299 = vmul.f32 %v1263, %v1273
      %v1300 = vmul.f32 %v1264, %v1273
      %v1301 = vmul.f32 %v1265, %v1273
      %v1302 = vmul.f32 %v1266, %v1273
      %v1303 = vmul.f32 %v1267, %v1273
      %v1304 = vmul.f32 %v1268, %v1273
      %v1305 = vmul.f32 %v1269, %v1273
      %v1306 = vadd.f32 %v1206, %v1274
      %v1307 = vadd.f32 %v1207, %v1275
      %v1308 = vadd.f32 %v1208, %v1276
      %v1309 = vadd.f32 %v1209, %v1277
      %v1310 = vadd.f32 %v1210, %v1278
      %v1311 = vadd.f32 %v1211, %v1279
      %v1312 = vadd.f32 %v1212, %v1280
      %v1313 = vadd.f32 %v1213, %v1281
      %v1314 = vadd.f32 %v1214, %v1282
      %v1315 = vadd.f32 %v1215, %v1283
      %v1316 = vadd.f32 %v1216, %v1284
      %v1317 = vadd.f32 %v1217, %v1285
      %v1318 = vadd.f32 %v1218, %v1286
      %v1319 = vadd.f32 %v1219, %v1287
      %v1320 = vadd.f32 %v1220, %v1288
      %v1321 = vadd.f32 %v1221, %v1289
      %v1322 = vadd.f32 %v1222, %v1290
      %v1323 = vadd.f32 %v1223, %v1291
      %v1324 = vadd.f32 %v1224, %v1292
      %v1325 = vadd.f32 %v1225, %v1293
      %v1326 = vadd.f32 %v1226, %v1294
      %v1327 = vadd.f32 %v1227, %v1295
      %v1328 = vadd.f32 %v1228, %v1296
      %v1329 = vadd.f32 %v1229, %v1297
      %v1330 = vadd.f32 %v1230, %v1298
      %v1331 = vadd.f32 %v1231, %v1299
      %v1332 = vadd.f32 %v1232, %v1300
      %v1333 = vadd.f32 %v1233, %v1301
      %v1334 = vadd.f32 %v1234, %v1302
      %v1335 = vadd.f32 %v1235, %v1303
      %v1336 = vadd.f32 %v1236, %v1304
      %v1337 = vadd.f32 %v1237, %v1305
      %v1338 = vld [vmem:[%s903 + $0x1] sm:$0xff]
      %v1339 = vld [vmem:[%s903 + $0x9] sm:$0xff]
      %v1340 = vld [vmem:[%s903 + $0x19] sm:$0xff]
      %v1341 = vld [vmem:[%s903 + $0x21] sm:$0xff]
      %v1342 = vld [vmem:[%s903 + $0x31] sm:$0xff]
      %v1343 = vld [vmem:[%s903 + $0x39] sm:$0xff]
      %v1344 = vld [vmem:[%s903 + $0x49] sm:$0xff]
      %v1345 = vld [vmem:[%s903 + $0x51] sm:$0xff]
      %v1346 = vld [vmem:[%s903 + $0x61] sm:$0xff]
      %v1347 = vld [vmem:[%s903 + $0x69] sm:$0xff]
      %v1348 = vld [vmem:[%s903 + $0x79] sm:$0xff]
      %v1349 = vld [vmem:[%s903 + $0x81] sm:$0xff]
      %v1350 = vld [vmem:[%s903 + $0x91] sm:$0xff]
      %v1351 = vld [vmem:[%s903 + $0x99] sm:$0xff]
      %v1352 = vld [vmem:[%s903 + $0xa9] sm:$0xff]
      %v1353 = vld [vmem:[%s903 + $0xb1] sm:$0xff]
      %v1354 = vld [vmem:[%s903 + $0xc1] sm:$0xff]
      %v1355 = vld [vmem:[%s903 + $0xc9] sm:$0xff]
      %v1356 = vld [vmem:[%s903 + $0xd9] sm:$0xff]
      %v1357 = vld [vmem:[%s903 + $0xe1] sm:$0xff]
      %v1358 = vld [vmem:[%s903 + $0xf1] sm:$0xff]
      %v1359 = vld [vmem:[%s903 + $0xf9] sm:$0xff]
      %v1360 = vld [vmem:[%s903 + $0x109] sm:$0xff]
      %v1361 = vld [vmem:[%s903 + $0x111] sm:$0xff]
      %v1362 = vld [vmem:[%s903 + $0x121] sm:$0xff]
      %v1363 = vld [vmem:[%s903 + $0x129] sm:$0xff]
      %v1364 = vld [vmem:[%s903 + $0x139] sm:$0xff]
      %v1365 = vld [vmem:[%s903 + $0x141] sm:$0xff]
      %v1366 = vld [vmem:[%s903 + $0x151] sm:$0xff]
      %v1367 = vld [vmem:[%s903 + $0x159] sm:$0xff]
      %v1368 = vld [vmem:[%s903 + $0x169] sm:$0xff]
      %v1369 = vld [vmem:[%s903 + $0x171] sm:$0xff]
      %v1370 = vlaneseq
      %v1371 = vshrl.u32 %v1370, 7
      %v1372 = vsub.s32 4, %v1371
      %v1373 = vrot.slane %v936, %v1372
      %v1374 = vmul.f32 %v1338, %v1373
      %v1375 = vmul.f32 %v1339, %v1373
      %v1376 = vmul.f32 %v1340, %v1373
      %v1377 = vmul.f32 %v1341, %v1373
      %v1378 = vmul.f32 %v1342, %v1373
      %v1379 = vmul.f32 %v1343, %v1373
      %v1380 = vmul.f32 %v1344, %v1373
      %v1381 = vmul.f32 %v1345, %v1373
      %v1382 = vmul.f32 %v1346, %v1373
      %v1383 = vmul.f32 %v1347, %v1373
      %v1384 = vmul.f32 %v1348, %v1373
      %v1385 = vmul.f32 %v1349, %v1373
      %v1386 = vmul.f32 %v1350, %v1373
      %v1387 = vmul.f32 %v1351, %v1373
      %v1388 = vmul.f32 %v1352, %v1373
      %v1389 = vmul.f32 %v1353, %v1373
      %v1390 = vmul.f32 %v1354, %v1373
      %v1391 = vmul.f32 %v1355, %v1373
      %v1392 = vmul.f32 %v1356, %v1373
      %v1393 = vmul.f32 %v1357, %v1373
      %v1394 = vmul.f32 %v1358, %v1373
      %v1395 = vmul.f32 %v1359, %v1373
      %v1396 = vmul.f32 %v1360, %v1373
      %v1397 = vmul.f32 %v1361, %v1373
      %v1398 = vmul.f32 %v1362, %v1373
      %v1399 = vmul.f32 %v1363, %v1373
      %v1400 = vmul.f32 %v1364, %v1373
      %v1401 = vmul.f32 %v1365, %v1373
      %v1402 = vmul.f32 %v1366, %v1373
      %v1403 = vmul.f32 %v1367, %v1373
      %v1404 = vmul.f32 %v1368, %v1373
      %v1405 = vmul.f32 %v1369, %v1373
      %v1406 = vadd.f32 %v1306, %v1374
      %v1407 = vadd.f32 %v1307, %v1375
      %v1408 = vadd.f32 %v1308, %v1376
      %v1409 = vadd.f32 %v1309, %v1377
      %v1410 = vadd.f32 %v1310, %v1378
      %v1411 = vadd.f32 %v1311, %v1379
      %v1412 = vadd.f32 %v1312, %v1380
      %v1413 = vadd.f32 %v1313, %v1381
      %v1414 = vadd.f32 %v1314, %v1382
      %v1415 = vadd.f32 %v1315, %v1383
      %v1416 = vadd.f32 %v1316, %v1384
      %v1417 = vadd.f32 %v1317, %v1385
      %v1418 = vadd.f32 %v1318, %v1386
      %v1419 = vadd.f32 %v1319, %v1387
      %v1420 = vadd.f32 %v1320, %v1388
      %v1421 = vadd.f32 %v1321, %v1389
      %v1422 = vadd.f32 %v1322, %v1390
      %v1423 = vadd.f32 %v1323, %v1391
      %v1424 = vadd.f32 %v1324, %v1392
      %v1425 = vadd.f32 %v1325, %v1393
      %v1426 = vadd.f32 %v1326, %v1394
      %v1427 = vadd.f32 %v1327, %v1395
      %v1428 = vadd.f32 %v1328, %v1396
      %v1429 = vadd.f32 %v1329, %v1397
      %v1430 = vadd.f32 %v1330, %v1398
      %v1431 = vadd.f32 %v1331, %v1399
      %v1432 = vadd.f32 %v1332, %v1400
      %v1433 = vadd.f32 %v1333, %v1401
      %v1434 = vadd.f32 %v1334, %v1402
      %v1435 = vadd.f32 %v1335, %v1403
      %v1436 = vadd.f32 %v1336, %v1404
      %v1437 = vadd.f32 %v1337, %v1405
      %v1438 = vld [vmem:[%s903 + $0x2] sm:$0xff]
      %v1439 = vld [vmem:[%s903 + $0xa] sm:$0xff]
      %v1440 = vld [vmem:[%s903 + $0x1a] sm:$0xff]
      %v1441 = vld [vmem:[%s903 + $0x22] sm:$0xff]
      %v1442 = vld [vmem:[%s903 + $0x32] sm:$0xff]
      %v1443 = vld [vmem:[%s903 + $0x3a] sm:$0xff]
      %v1444 = vld [vmem:[%s903 + $0x4a] sm:$0xff]
      %v1445 = vld [vmem:[%s903 + $0x52] sm:$0xff]
      %v1446 = vld [vmem:[%s903 + $0x62] sm:$0xff]
      %v1447 = vld [vmem:[%s903 + $0x6a] sm:$0xff]
      %v1448 = vld [vmem:[%s903 + $0x7a] sm:$0xff]
      %v1449 = vld [vmem:[%s903 + $0x82] sm:$0xff]
      %v1450 = vld [vmem:[%s903 + $0x92] sm:$0xff]
      %v1451 = vld [vmem:[%s903 + $0x9a] sm:$0xff]
      %v1452 = vld [vmem:[%s903 + $0xaa] sm:$0xff]
      %v1453 = vld [vmem:[%s903 + $0xb2] sm:$0xff]
      %v1454 = vld [vmem:[%s903 + $0xc2] sm:$0xff]
      %v1455 = vld [vmem:[%s903 + $0xca] sm:$0xff]
      %v1456 = vld [vmem:[%s903 + $0xda] sm:$0xff]
      %v1457 = vld [vmem:[%s903 + $0xe2] sm:$0xff]
      %v1458 = vld [vmem:[%s903 + $0xf2] sm:$0xff]
      %v1459 = vld [vmem:[%s903 + $0xfa] sm:$0xff]
      %v1460 = vld [vmem:[%s903 + $0x10a] sm:$0xff]
      %v1461 = vld [vmem:[%s903 + $0x112] sm:$0xff]
      %v1462 = vld [vmem:[%s903 + $0x122] sm:$0xff]
      %v1463 = vld [vmem:[%s903 + $0x12a] sm:$0xff]
      %v1464 = vld [vmem:[%s903 + $0x13a] sm:$0xff]
      %v1465 = vld [vmem:[%s903 + $0x142] sm:$0xff]
      %v1466 = vld [vmem:[%s903 + $0x152] sm:$0xff]
      %v1467 = vld [vmem:[%s903 + $0x15a] sm:$0xff]
      %v1468 = vld [vmem:[%s903 + $0x16a] sm:$0xff]
      %v1469 = vld [vmem:[%s903 + $0x172] sm:$0xff]
      %v1470 = vlaneseq
      %v1471 = vshrl.u32 %v1470, 7
      %v1472 = vsub.s32 5, %v1471
      %v1473 = vrot.slane %v936, %v1472
      %v1474 = vmul.f32 %v1438, %v1473
      %v1475 = vmul.f32 %v1439, %v1473
      %v1476 = vmul.f32 %v1440, %v1473
      %v1477 = vmul.f32 %v1441, %v1473
      %v1478 = vmul.f32 %v1442, %v1473
      %v1479 = vmul.f32 %v1443, %v1473
      %v1480 = vmul.f32 %v1444, %v1473
      %v1481 = vmul.f32 %v1445, %v1473
      %v1482 = vmul.f32 %v1446, %v1473
      %v1483 = vmul.f32 %v1447, %v1473
      %v1484 = vmul.f32 %v1448, %v1473
      %v1485 = vmul.f32 %v1449, %v1473
      %v1486 = vmul.f32 %v1450, %v1473
      %v1487 = vmul.f32 %v1451, %v1473
      %v1488 = vmul.f32 %v1452, %v1473
      %v1489 = vmul.f32 %v1453, %v1473
      %v1490 = vmul.f32 %v1454, %v1473
      %v1491 = vmul.f32 %v1455, %v1473
      %v1492 = vmul.f32 %v1456, %v1473
      %v1493 = vmul.f32 %v1457, %v1473
      %v1494 = vmul.f32 %v1458, %v1473
      %v1495 = vmul.f32 %v1459, %v1473
      %v1496 = vmul.f32 %v1460, %v1473
      %v1497 = vmul.f32 %v1461, %v1473
      %v1498 = vmul.f32 %v1462, %v1473
      %v1499 = vmul.f32 %v1463, %v1473
      %v1500 = vmul.f32 %v1464, %v1473
      %v1501 = vmul.f32 %v1465, %v1473
      %v1502 = vmul.f32 %v1466, %v1473
      %v1503 = vmul.f32 %v1467, %v1473
      %v1504 = vmul.f32 %v1468, %v1473
      %v1505 = vmul.f32 %v1469, %v1473
      %v1506 = vadd.f32 %v1406, %v1474
      %v1507 = vadd.f32 %v1407, %v1475
      %v1508 = vadd.f32 %v1408, %v1476
      %v1509 = vadd.f32 %v1409, %v1477
      %v1510 = vadd.f32 %v1410, %v1478
      %v1511 = vadd.f32 %v1411, %v1479
      %v1512 = vadd.f32 %v1412, %v1480
      %v1513 = vadd.f32 %v1413, %v1481
      %v1514 = vadd.f32 %v1414, %v1482
      %v1515 = vadd.f32 %v1415, %v1483
      %v1516 = vadd.f32 %v1416, %v1484
      %v1517 = vadd.f32 %v1417, %v1485
      %v1518 = vadd.f32 %v1418, %v1486
      %v1519 = vadd.f32 %v1419, %v1487
      %v1520 = vadd.f32 %v1420, %v1488
      %v1521 = vadd.f32 %v1421, %v1489
      %v1522 = vadd.f32 %v1422, %v1490
      %v1523 = vadd.f32 %v1423, %v1491
      %v1524 = vadd.f32 %v1424, %v1492
      %v1525 = vadd.f32 %v1425, %v1493
      %v1526 = vadd.f32 %v1426, %v1494
      %v1527 = vadd.f32 %v1427, %v1495
      %v1528 = vadd.f32 %v1428, %v1496
      %v1529 = vadd.f32 %v1429, %v1497
      %v1530 = vadd.f32 %v1430, %v1498
      %v1531 = vadd.f32 %v1431, %v1499
      %v1532 = vadd.f32 %v1432, %v1500
      %v1533 = vadd.f32 %v1433, %v1501
      %v1534 = vadd.f32 %v1434, %v1502
      %v1535 = vadd.f32 %v1435, %v1503
      %v1536 = vadd.f32 %v1436, %v1504
      %v1537 = vadd.f32 %v1437, %v1505
      %s1538 = scalar_lea.vmem [#allocation2], 48
      %v1539 = vld [vmem:[%s1538] sm:$0xff]
      %v1540 = vld [vmem:[%s1538 + $0x8] sm:$0xff]
      %v1541 = vld [vmem:[%s1538 + $0x18] sm:$0xff]
      %v1542 = vld [vmem:[%s1538 + $0x20] sm:$0xff]
      %v1543 = vld [vmem:[%s1538 + $0x30] sm:$0xff]
      %v1544 = vld [vmem:[%s1538 + $0x38] sm:$0xff]
      %v1545 = vld [vmem:[%s1538 + $0x48] sm:$0xff]
      %v1546 = vld [vmem:[%s1538 + $0x50] sm:$0xff]
      %v1547 = vld [vmem:[%s1538 + $0x60] sm:$0xff]
      %v1548 = vld [vmem:[%s1538 + $0x68] sm:$0xff]
      %v1549 = vld [vmem:[%s1538 + $0x78] sm:$0xff]
      %v1550 = vld [vmem:[%s1538 + $0x80] sm:$0xff]
      %v1551 = vld [vmem:[%s1538 + $0x90] sm:$0xff]
      %v1552 = vld [vmem:[%s1538 + $0x98] sm:$0xff]
      %v1553 = vld [vmem:[%s1538 + $0xa8] sm:$0xff]
      %v1554 = vld [vmem:[%s1538 + $0xb0] sm:$0xff]
      %v1555 = vld [vmem:[%s1538 + $0xc0] sm:$0xff]
      %v1556 = vld [vmem:[%s1538 + $0xc8] sm:$0xff]
      %v1557 = vld [vmem:[%s1538 + $0xd8] sm:$0xff]
      %v1558 = vld [vmem:[%s1538 + $0xe0] sm:$0xff]
      %v1559 = vld [vmem:[%s1538 + $0xf0] sm:$0xff]
      %v1560 = vld [vmem:[%s1538 + $0xf8] sm:$0xff]
      %v1561 = vld [vmem:[%s1538 + $0x108] sm:$0xff]
      %v1562 = vld [vmem:[%s1538 + $0x110] sm:$0xff]
      %v1563 = vld [vmem:[%s1538 + $0x120] sm:$0xff]
      %v1564 = vld [vmem:[%s1538 + $0x128] sm:$0xff]
      %v1565 = vld [vmem:[%s1538 + $0x138] sm:$0xff]
      %v1566 = vld [vmem:[%s1538 + $0x140] sm:$0xff]
      %v1567 = vld [vmem:[%s1538 + $0x150] sm:$0xff]
      %v1568 = vld [vmem:[%s1538 + $0x158] sm:$0xff]
      %v1569 = vld [vmem:[%s1538 + $0x168] sm:$0xff]
      %v1570 = vld [vmem:[%s1538 + $0x170] sm:$0xff]
      %v1571 = vlaneseq
      %v1572 = vshrl.u32 %v1571, 7
      %v1573 = vsub.s32 6, %v1572
      %v1574 = vrot.slane %v936, %v1573
      %v1575 = vmul.f32 %v1539, %v1574
      %v1576 = vmul.f32 %v1540, %v1574
      %v1577 = vmul.f32 %v1541, %v1574
      %v1578 = vmul.f32 %v1542, %v1574
      %v1579 = vmul.f32 %v1543, %v1574
      %v1580 = vmul.f32 %v1544, %v1574
      %v1581 = vmul.f32 %v1545, %v1574
      %v1582 = vmul.f32 %v1546, %v1574
      %v1583 = vmul.f32 %v1547, %v1574
      %v1584 = vmul.f32 %v1548, %v1574
      %v1585 = vmul.f32 %v1549, %v1574
      %v1586 = vmul.f32 %v1550, %v1574
      %v1587 = vmul.f32 %v1551, %v1574
      %v1588 = vmul.f32 %v1552, %v1574
      %v1589 = vmul.f32 %v1553, %v1574
      %v1590 = vmul.f32 %v1554, %v1574
      %v1591 = vmul.f32 %v1555, %v1574
      %v1592 = vmul.f32 %v1556, %v1574
      %v1593 = vmul.f32 %v1557, %v1574
      %v1594 = vmul.f32 %v1558, %v1574
      %v1595 = vmul.f32 %v1559, %v1574
      %v1596 = vmul.f32 %v1560, %v1574
      %v1597 = vmul.f32 %v1561, %v1574
      %v1598 = vmul.f32 %v1562, %v1574
      %v1599 = vmul.f32 %v1563, %v1574
      %v1600 = vmul.f32 %v1564, %v1574
      %v1601 = vmul.f32 %v1565, %v1574
      %v1602 = vmul.f32 %v1566, %v1574
      %v1603 = vmul.f32 %v1567, %v1574
      %v1604 = vmul.f32 %v1568, %v1574
      %v1605 = vmul.f32 %v1569, %v1574
      %v1606 = vmul.f32 %v1570, %v1574
      %v1607 = vadd.f32 %v1506, %v1575
      %v1608 = vadd.f32 %v1507, %v1576
      %v1609 = vadd.f32 %v1508, %v1577
      %v1610 = vadd.f32 %v1509, %v1578
      %v1611 = vadd.f32 %v1510, %v1579
      %v1612 = vadd.f32 %v1511, %v1580
      %v1613 = vadd.f32 %v1512, %v1581
      %v1614 = vadd.f32 %v1513, %v1582
      %v1615 = vadd.f32 %v1514, %v1583
      %v1616 = vadd.f32 %v1515, %v1584
      %v1617 = vadd.f32 %v1516, %v1585
      %v1618 = vadd.f32 %v1517, %v1586
      %v1619 = vadd.f32 %v1518, %v1587
      %v1620 = vadd.f32 %v1519, %v1588
      %v1621 = vadd.f32 %v1520, %v1589
      %v1622 = vadd.f32 %v1521, %v1590
      %v1623 = vadd.f32 %v1522, %v1591
      %v1624 = vadd.f32 %v1523, %v1592
      %v1625 = vadd.f32 %v1524, %v1593
      %v1626 = vadd.f32 %v1525, %v1594
      %v1627 = vadd.f32 %v1526, %v1595
      %v1628 = vadd.f32 %v1527, %v1596
      %v1629 = vadd.f32 %v1528, %v1597
      %v1630 = vadd.f32 %v1529, %v1598
      %v1631 = vadd.f32 %v1530, %v1599
      %v1632 = vadd.f32 %v1531, %v1600
      %v1633 = vadd.f32 %v1532, %v1601
      %v1634 = vadd.f32 %v1533, %v1602
      %v1635 = vadd.f32 %v1534, %v1603
      %v1636 = vadd.f32 %v1535, %v1604
      %v1637 = vadd.f32 %v1536, %v1605
      %v1638 = vadd.f32 %v1537, %v1606
      %v1639 = vld [vmem:[%s1538 + $0x1] sm:$0xff]
      %v1640 = vld [vmem:[%s1538 + $0x9] sm:$0xff]
      %v1641 = vld [vmem:[%s1538 + $0x19] sm:$0xff]
      %v1642 = vld [vmem:[%s1538 + $0x21] sm:$0xff]
      %v1643 = vld [vmem:[%s1538 + $0x31] sm:$0xff]
      %v1644 = vld [vmem:[%s1538 + $0x39] sm:$0xff]
      %v1645 = vld [vmem:[%s1538 + $0x49] sm:$0xff]
      %v1646 = vld [vmem:[%s1538 + $0x51] sm:$0xff]
      %v1647 = vld [vmem:[%s1538 + $0x61] sm:$0xff]
      %v1648 = vld [vmem:[%s1538 + $0x69] sm:$0xff]
      %v1649 = vld [vmem:[%s1538 + $0x79] sm:$0xff]
      %v1650 = vld [vmem:[%s1538 + $0x81] sm:$0xff]
      %v1651 = vld [vmem:[%s1538 + $0x91] sm:$0xff]
      %v1652 = vld [vmem:[%s1538 + $0x99] sm:$0xff]
      %v1653 = vld [vmem:[%s1538 + $0xa9] sm:$0xff]
      %v1654 = vld [vmem:[%s1538 + $0xb1] sm:$0xff]
      %v1655 = vld [vmem:[%s1538 + $0xc1] sm:$0xff]
      %v1656 = vld [vmem:[%s1538 + $0xc9] sm:$0xff]
      %v1657 = vld [vmem:[%s1538 + $0xd9] sm:$0xff]
      %v1658 = vld [vmem:[%s1538 + $0xe1] sm:$0xff]
      %v1659 = vld [vmem:[%s1538 + $0xf1] sm:$0xff]
      %v1660 = vld [vmem:[%s1538 + $0xf9] sm:$0xff]
      %v1661 = vld [vmem:[%s1538 + $0x109] sm:$0xff]
      %v1662 = vld [vmem:[%s1538 + $0x111] sm:$0xff]
      %v1663 = vld [vmem:[%s1538 + $0x121] sm:$0xff]
      %v1664 = vld [vmem:[%s1538 + $0x129] sm:$0xff]
      %v1665 = vld [vmem:[%s1538 + $0x139] sm:$0xff]
      %v1666 = vld [vmem:[%s1538 + $0x141] sm:$0xff]
      %v1667 = vld [vmem:[%s1538 + $0x151] sm:$0xff]
      %v1668 = vld [vmem:[%s1538 + $0x159] sm:$0xff]
      %v1669 = vld [vmem:[%s1538 + $0x169] sm:$0xff]
      %v1670 = vld [vmem:[%s1538 + $0x171] sm:$0xff]
      %v1671 = vlaneseq
      %v1672 = vshrl.u32 %v1671, 7
      %v1673 = vsub.s32 7, %v1672
      %v1674 = vrot.slane %v936, %v1673
      %v1675 = vmul.f32 %v1639, %v1674
      %v1676 = vmul.f32 %v1640, %v1674
      %v1677 = vmul.f32 %v1641, %v1674
      %v1678 = vmul.f32 %v1642, %v1674
      %v1679 = vmul.f32 %v1643, %v1674
      %v1680 = vmul.f32 %v1644, %v1674
      %v1681 = vmul.f32 %v1645, %v1674
      %v1682 = vmul.f32 %v1646, %v1674
      %v1683 = vmul.f32 %v1647, %v1674
      %v1684 = vmul.f32 %v1648, %v1674
      %v1685 = vmul.f32 %v1649, %v1674
      %v1686 = vmul.f32 %v1650, %v1674
      %v1687 = vmul.f32 %v1651, %v1674
      %v1688 = vmul.f32 %v1652, %v1674
      %v1689 = vmul.f32 %v1653, %v1674
      %v1690 = vmul.f32 %v1654, %v1674
      %v1691 = vmul.f32 %v1655, %v1674
      %v1692 = vmul.f32 %v1656, %v1674
      %v1693 = vmul.f32 %v1657, %v1674
      %v1694 = vmul.f32 %v1658, %v1674
      %v1695 = vmul.f32 %v1659, %v1674
      %v1696 = vmul.f32 %v1660, %v1674
      %v1697 = vmul.f32 %v1661, %v1674
      %v1698 = vmul.f32 %v1662, %v1674
      %v1699 = vmul.f32 %v1663, %v1674
      %v1700 = vmul.f32 %v1664, %v1674
      %v1701 = vmul.f32 %v1665, %v1674
      %v1702 = vmul.f32 %v1666, %v1674
      %v1703 = vmul.f32 %v1667, %v1674
      %v1704 = vmul.f32 %v1668, %v1674
      %v1705 = vmul.f32 %v1669, %v1674
      %v1706 = vmul.f32 %v1670, %v1674
      %v1707 = vadd.f32 %v1607, %v1675
      %v1708 = vadd.f32 %v1608, %v1676
      %v1709 = vadd.f32 %v1609, %v1677
      %v1710 = vadd.f32 %v1610, %v1678
      %v1711 = vadd.f32 %v1611, %v1679
      %v1712 = vadd.f32 %v1612, %v1680
      %v1713 = vadd.f32 %v1613, %v1681
      %v1714 = vadd.f32 %v1614, %v1682
      %v1715 = vadd.f32 %v1615, %v1683
      %v1716 = vadd.f32 %v1616, %v1684
      %v1717 = vadd.f32 %v1617, %v1685
      %v1718 = vadd.f32 %v1618, %v1686
      %v1719 = vadd.f32 %v1619, %v1687
      %v1720 = vadd.f32 %v1620, %v1688
      %v1721 = vadd.f32 %v1621, %v1689
      %v1722 = vadd.f32 %v1622, %v1690
      %v1723 = vadd.f32 %v1623, %v1691
      %v1724 = vadd.f32 %v1624, %v1692
      %v1725 = vadd.f32 %v1625, %v1693
      %v1726 = vadd.f32 %v1626, %v1694
      %v1727 = vadd.f32 %v1627, %v1695
      %v1728 = vadd.f32 %v1628, %v1696
      %v1729 = vadd.f32 %v1629, %v1697
      %v1730 = vadd.f32 %v1630, %v1698
      %v1731 = vadd.f32 %v1631, %v1699
      %v1732 = vadd.f32 %v1632, %v1700
      %v1733 = vadd.f32 %v1633, %v1701
      %v1734 = vadd.f32 %v1634, %v1702
      %v1735 = vadd.f32 %v1635, %v1703
      %v1736 = vadd.f32 %v1636, %v1704
      %v1737 = vadd.f32 %v1637, %v1705
      %v1738 = vadd.f32 %v1638, %v1706
      %v1739 = vld [vmem:[%s1538 + $0x2] sm:$0xff]
      %v1740 = vld [vmem:[%s1538 + $0xa] sm:$0xff]
      %v1741 = vld [vmem:[%s1538 + $0x1a] sm:$0xff]
      %v1742 = vld [vmem:[%s1538 + $0x22] sm:$0xff]
      %v1743 = vld [vmem:[%s1538 + $0x32] sm:$0xff]
      %v1744 = vld [vmem:[%s1538 + $0x3a] sm:$0xff]
      %v1745 = vld [vmem:[%s1538 + $0x4a] sm:$0xff]
      %v1746 = vld [vmem:[%s1538 + $0x52] sm:$0xff]
      %v1747 = vld [vmem:[%s1538 + $0x62] sm:$0xff]
      %v1748 = vld [vmem:[%s1538 + $0x6a] sm:$0xff]
      %v1749 = vld [vmem:[%s1538 + $0x7a] sm:$0xff]
      %v1750 = vld [vmem:[%s1538 + $0x82] sm:$0xff]
      %v1751 = vld [vmem:[%s1538 + $0x92] sm:$0xff]
      %v1752 = vld [vmem:[%s1538 + $0x9a] sm:$0xff]
      %v1753 = vld [vmem:[%s1538 + $0xaa] sm:$0xff]
      %v1754 = vld [vmem:[%s1538 + $0xb2] sm:$0xff]
      %v1755 = vld [vmem:[%s1538 + $0xc2] sm:$0xff]
      %v1756 = vld [vmem:[%s1538 + $0xca] sm:$0xff]
      %v1757 = vld [vmem:[%s1538 + $0xda] sm:$0xff]
      %v1758 = vld [vmem:[%s1538 + $0xe2] sm:$0xff]
      %v1759 = vld [vmem:[%s1538 + $0xf2] sm:$0xff]
      %v1760 = vld [vmem:[%s1538 + $0xfa] sm:$0xff]
      %v1761 = vld [vmem:[%s1538 + $0x10a] sm:$0xff]
      %v1762 = vld [vmem:[%s1538 + $0x112] sm:$0xff]
      %v1763 = vld [vmem:[%s1538 + $0x122] sm:$0xff]
      %v1764 = vld [vmem:[%s1538 + $0x12a] sm:$0xff]
      %v1765 = vld [vmem:[%s1538 + $0x13a] sm:$0xff]
      %v1766 = vld [vmem:[%s1538 + $0x142] sm:$0xff]
      %v1767 = vld [vmem:[%s1538 + $0x152] sm:$0xff]
      %v1768 = vld [vmem:[%s1538 + $0x15a] sm:$0xff]
      %v1769 = vld [vmem:[%s1538 + $0x16a] sm:$0xff]
      %v1770 = vld [vmem:[%s1538 + $0x172] sm:$0xff]
      %v1771 = vlaneseq
      %v1772 = vshrl.u32 %v1771, 7
      %v1773 = vsub.s32 0, %v1772
      %v1774 = vrot.slane %v937, %v1773
      %v1775 = vmul.f32 %v1739, %v1774
      %v1776 = vmul.f32 %v1740, %v1774
      %v1777 = vmul.f32 %v1741, %v1774
      %v1778 = vmul.f32 %v1742, %v1774
      %v1779 = vmul.f32 %v1743, %v1774
      %v1780 = vmul.f32 %v1744, %v1774
      %v1781 = vmul.f32 %v1745, %v1774
      %v1782 = vmul.f32 %v1746, %v1774
      %v1783 = vmul.f32 %v1747, %v1774
      %v1784 = vmul.f32 %v1748, %v1774
      %v1785 = vmul.f32 %v1749, %v1774
      %v1786 = vmul.f32 %v1750, %v1774
      %v1787 = vmul.f32 %v1751, %v1774
      %v1788 = vmul.f32 %v1752, %v1774
      %v1789 = vmul.f32 %v1753, %v1774
      %v1790 = vmul.f32 %v1754, %v1774
      %v1791 = vmul.f32 %v1755, %v1774
      %v1792 = vmul.f32 %v1756, %v1774
      %v1793 = vmul.f32 %v1757, %v1774
      %v1794 = vmul.f32 %v1758, %v1774
      %v1795 = vmul.f32 %v1759, %v1774
      %v1796 = vmul.f32 %v1760, %v1774
      %v1797 = vmul.f32 %v1761, %v1774
      %v1798 = vmul.f32 %v1762, %v1774
      %v1799 = vmul.f32 %v1763, %v1774
      %v1800 = vmul.f32 %v1764, %v1774
      %v1801 = vmul.f32 %v1765, %v1774
      %v1802 = vmul.f32 %v1766, %v1774
      %v1803 = vmul.f32 %v1767, %v1774
      %v1804 = vmul.f32 %v1768, %v1774
      %v1805 = vmul.f32 %v1769, %v1774
      %v1806 = vmul.f32 %v1770, %v1774
      %v1807 = vadd.f32 %v1707, %v1775
      %v1808 = vadd.f32 %v1708, %v1776
      %v1809 = vadd.f32 %v1709, %v1777
      %v1810 = vadd.f32 %v1710, %v1778
      %v1811 = vadd.f32 %v1711, %v1779
      %v1812 = vadd.f32 %v1712, %v1780
      %v1813 = vadd.f32 %v1713, %v1781
      %v1814 = vadd.f32 %v1714, %v1782
      %v1815 = vadd.f32 %v1715, %v1783
      %v1816 = vadd.f32 %v1716, %v1784
      %v1817 = vadd.f32 %v1717, %v1785
      %v1818 = vadd.f32 %v1718, %v1786
      %v1819 = vadd.f32 %v1719, %v1787
      %v1820 = vadd.f32 %v1720, %v1788
      %v1821 = vadd.f32 %v1721, %v1789
      %v1822 = vadd.f32 %v1722, %v1790
      %v1823 = vadd.f32 %v1723, %v1791
      %v1824 = vadd.f32 %v1724, %v1792
      %v1825 = vadd.f32 %v1725, %v1793
      %v1826 = vadd.f32 %v1726, %v1794
      %v1827 = vadd.f32 %v1727, %v1795
      %v1828 = vadd.f32 %v1728, %v1796
      %v1829 = vadd.f32 %v1729, %v1797
      %v1830 = vadd.f32 %v1730, %v1798
      %v1831 = vadd.f32 %v1731, %v1799
      %v1832 = vadd.f32 %v1732, %v1800
      %v1833 = vadd.f32 %v1733, %v1801
      %v1834 = vadd.f32 %v1734, %v1802
      %v1835 = vadd.f32 %v1735, %v1803
      %v1836 = vadd.f32 %v1736, %v1804
      %v1837 = vadd.f32 %v1737, %v1805
      %v1838 = vadd.f32 %v1738, %v1806
      %v1839 = vld [vmem:[%s5] sm:$0x1]
      %v1841 = vlaneseq
      %v1842 = vshrl.u32 %v1841, 7
      %v1843 = vsub.s32 0, %v1842
      %v1844 = vrot.slane %v1839, %v1843
      %v1846 = vmul.f32 %v1807, %v1844
      %v1847 = vmul.f32 %v1808, %v1844
      %v1848 = vmul.f32 %v1809, %v1844
      %v1849 = vmul.f32 %v1810, %v1844
      %v1850 = vmul.f32 %v1811, %v1844
      %v1851 = vmul.f32 %v1812, %v1844
      %v1852 = vmul.f32 %v1813, %v1844
      %v1853 = vmul.f32 %v1814, %v1844
      %v1854 = vmul.f32 %v1815, %v1844
      %v1855 = vmul.f32 %v1816, %v1844
      %v1856 = vmul.f32 %v1817, %v1844
      %v1857 = vmul.f32 %v1818, %v1844
      %v1858 = vmul.f32 %v1819, %v1844
      %v1859 = vmul.f32 %v1820, %v1844
      %v1860 = vmul.f32 %v1821, %v1844
      %v1861 = vmul.f32 %v1822, %v1844
      %v1862 = vmul.f32 %v1823, %v1844
      %v1863 = vmul.f32 %v1824, %v1844
      %v1864 = vmul.f32 %v1825, %v1844
      %v1865 = vmul.f32 %v1826, %v1844
      %v1866 = vmul.f32 %v1827, %v1844
      %v1867 = vmul.f32 %v1828, %v1844
      %v1868 = vmul.f32 %v1829, %v1844
      %v1869 = vmul.f32 %v1830, %v1844
      %v1870 = vmul.f32 %v1831, %v1844
      %v1871 = vmul.f32 %v1832, %v1844
      %v1872 = vmul.f32 %v1833, %v1844
      %v1873 = vmul.f32 %v1834, %v1844
      %v1874 = vmul.f32 %v1835, %v1844
      %v1875 = vmul.f32 %v1836, %v1844
      %v1876 = vmul.f32 %v1837, %v1844
      %v1877 = vmul.f32 %v1838, %v1844
      %v1878 = vld [vmem:[%s6] sm:$0x1]
      %v1880 = vlaneseq
      %v1881 = vshrl.u32 %v1880, 7
      %v1882 = vsub.s32 0, %v1881
      %v1883 = vrot.slane %v1878, %v1882
      %v1885 = vadd.f32 %v1846, %v1883
      %v1886 = vadd.f32 %v1847, %v1883
      %v1887 = vadd.f32 %v1848, %v1883
      %v1888 = vadd.f32 %v1849, %v1883
      %v1889 = vadd.f32 %v1850, %v1883
      %v1890 = vadd.f32 %v1851, %v1883
      %v1891 = vadd.f32 %v1852, %v1883
      %v1892 = vadd.f32 %v1853, %v1883
      %v1893 = vadd.f32 %v1854, %v1883
      %v1894 = vadd.f32 %v1855, %v1883
      %v1895 = vadd.f32 %v1856, %v1883
      %v1896 = vadd.f32 %v1857, %v1883
      %v1897 = vadd.f32 %v1858, %v1883
      %v1898 = vadd.f32 %v1859, %v1883
      %v1899 = vadd.f32 %v1860, %v1883
      %v1900 = vadd.f32 %v1861, %v1883
      %v1901 = vadd.f32 %v1862, %v1883
      %v1902 = vadd.f32 %v1863, %v1883
      %v1903 = vadd.f32 %v1864, %v1883
      %v1904 = vadd.f32 %v1865, %v1883
      %v1905 = vadd.f32 %v1866, %v1883
      %v1906 = vadd.f32 %v1867, %v1883
      %v1907 = vadd.f32 %v1868, %v1883
      %v1908 = vadd.f32 %v1869, %v1883
      %v1909 = vadd.f32 %v1870, %v1883
      %v1910 = vadd.f32 %v1871, %v1883
      %v1911 = vadd.f32 %v1872, %v1883
      %v1912 = vadd.f32 %v1873, %v1883
      %v1913 = vadd.f32 %v1874, %v1883
      %v1914 = vadd.f32 %v1875, %v1883
      %v1915 = vadd.f32 %v1876, %v1883
      %v1916 = vadd.f32 %v1877, %v1883
      %v1917 = vmax.f32 %v1885, 0.0
      %v1918 = vmax.f32 %v1886, 0.0
      %v1919 = vmax.f32 %v1887, 0.0
      %v1920 = vmax.f32 %v1888, 0.0
      %v1921 = vmax.f32 %v1889, 0.0
      %v1922 = vmax.f32 %v1890, 0.0
      %v1923 = vmax.f32 %v1891, 0.0
      %v1924 = vmax.f32 %v1892, 0.0
      %v1925 = vmax.f32 %v1893, 0.0
      %v1926 = vmax.f32 %v1894, 0.0
      %v1927 = vmax.f32 %v1895, 0.0
      %v1928 = vmax.f32 %v1896, 0.0
      %v1929 = vmax.f32 %v1897, 0.0
      %v1930 = vmax.f32 %v1898, 0.0
      %v1931 = vmax.f32 %v1899, 0.0
      %v1932 = vmax.f32 %v1900, 0.0
      %v1933 = vmax.f32 %v1901, 0.0
      %v1934 = vmax.f32 %v1902, 0.0
      %v1935 = vmax.f32 %v1903, 0.0
      %v1936 = vmax.f32 %v1904, 0.0
      %v1937 = vmax.f32 %v1905, 0.0
      %v1938 = vmax.f32 %v1906, 0.0
      %v1939 = vmax.f32 %v1907, 0.0
      %v1940 = vmax.f32 %v1908, 0.0
      %v1941 = vmax.f32 %v1909, 0.0
      %v1942 = vmax.f32 %v1910, 0.0
      %v1943 = vmax.f32 %v1911, 0.0
      %v1944 = vmax.f32 %v1912, 0.0
      %v1945 = vmax.f32 %v1913, 0.0
      %v1946 = vmax.f32 %v1914, 0.0
      %v1947 = vmax.f32 %v1915, 0.0
      %v1948 = vmax.f32 %v1916, 0.0
      %v1949 = vmin.f32 %v1917, 6.0
      %v1950 = vmin.f32 %v1918, 6.0
      %v1951 = vmin.f32 %v1919, 6.0
      %v1952 = vmin.f32 %v1920, 6.0
      %v1953 = vmin.f32 %v1921, 6.0
      %v1954 = vmin.f32 %v1922, 6.0
      %v1955 = vmin.f32 %v1923, 6.0
      %v1956 = vmin.f32 %v1924, 6.0
      %v1957 = vmin.f32 %v1925, 6.0
      %v1958 = vmin.f32 %v1926, 6.0
      %v1959 = vmin.f32 %v1927, 6.0
      %v1960 = vmin.f32 %v1928, 6.0
      %v1961 = vmin.f32 %v1929, 6.0
      %v1962 = vmin.f32 %v1930, 6.0
      %v1963 = vmin.f32 %v1931, 6.0
      %v1964 = vmin.f32 %v1932, 6.0
      %v1965 = vmin.f32 %v1933, 6.0
      %v1966 = vmin.f32 %v1934, 6.0
      %v1967 = vmin.f32 %v1935, 6.0
      %v1968 = vmin.f32 %v1936, 6.0
      %v1969 = vmin.f32 %v1937, 6.0
      %v1970 = vmin.f32 %v1938, 6.0
      %v1971 = vmin.f32 %v1939, 6.0
      %v1972 = vmin.f32 %v1940, 6.0
      %v1973 = vmin.f32 %v1941, 6.0
      %v1974 = vmin.f32 %v1942, 6.0
      %v1975 = vmin.f32 %v1943, 6.0
      %v1976 = vmin.f32 %v1944, 6.0
      %v1977 = vmin.f32 %v1945, 6.0
      %v1978 = vmin.f32 %v1946, 6.0
      %v1979 = vmin.f32 %v1947, 6.0
      %v1980 = vmin.f32 %v1948, 6.0
      %v1981 = vld [vmem:[%s7] sm:$0xff]
      %v1982 = vld [vmem:[%s7 + $0x8] sm:$0xff]
      %v1983 = vld [vmem:[%s7 + $0x10] sm:$0xff]
      %v1984 = vld [vmem:[%s7 + $0x18] sm:$0xff]
      %v1986 = vsel %vm360, %v1949, 0
      %v1989 = vsel %vm360, %v1950, 0
      %v1992 = vsel %vm360, %v1951, 0
      %v1995 = vsel %vm360, %v1952, 0
      %v1998 = vsel %vm360, %v1953, 0
      %v2001 = vsel %vm360, %v1954, 0
      %v2004 = vsel %vm360, %v1955, 0
      %v2007 = vsel %vm360, %v1956, 0
      %v2010 = vsel %vm360, %v1957, 0
      %v2013 = vsel %vm360, %v1958, 0
      %v2016 = vsel %vm360, %v1959, 0
      %v2019 = vsel %vm360, %v1960, 0
      %v2022 = vsel %vm360, %v1961, 0
      %v2025 = vsel %vm360, %v1962, 0
      %v2028 = vsel %vm360, %v1963, 0
      %v2031 = vsel %vm360, %v1964, 0
      %v2034 = vsel %vm360, %v1965, 0
      %v2037 = vsel %vm360, %v1966, 0
      %v2040 = vsel %vm360, %v1967, 0
      %v2043 = vsel %vm360, %v1968, 0
      %v2046 = vsel %vm360, %v1969, 0
      %v2049 = vsel %vm360, %v1970, 0
      %v2052 = vsel %vm360, %v1971, 0
      %v2055 = vsel %vm360, %v1972, 0
      %v2058 = vsel %vm360, %v1973, 0
      %v2061 = vsel %vm360, %v1974, 0
      %v2064 = vsel %vm360, %v1975, 0
      %v2067 = vsel %vm360, %v1976, 0
      %v2070 = vsel %vm360, %v1977, 0
      %v2073 = vsel %vm360, %v1978, 0
      %v2076 = vsel %vm360, %v1979, 0
      %v2079 = vsel %vm360, %v1980, 0
      %2081 = vmatprep.subr.mxu0 0.0
      %2082 = vmatpush1.msra.mxu0 0.0
      %2083 = vmatprep.subr.mxu0 0.0
      %2084 = vmatpush1.msra.mxu0 0.0
      %2085 = vmatprep.subr.mxu0 0.0
      %2086 = vmatpush1.msra.mxu0 0.0
      %2087 = vmatprep.subr.mxu0 0.0
      %2088 = vmatpush1.msra.mxu0 0.0
      %2089 = vmatprep.subr.mxu0 0.0
      %2090 = vmatpush1.msra.mxu0 0.0
      %2091 = vmatprep.subr.mxu0 0.0
      %2092 = vmatpush1.msra.mxu0 0.0
      %2093 = vmatprep.subr.mxu0 0.0
      %2094 = vmatpush1.msra.mxu0 0.0
      %2095 = vmatprep.subr.mxu0 0.0
      %2096 = vmatpush1.msra.mxu0 0.0
      %2097 = vmatprep.subr.mxu0 0.0
      %2098 = vmatpush1.msra.mxu0 0.0
      %2099 = vmatprep.subr.mxu0 0.0
      %2100 = vmatpush1.msra.mxu0 0.0
      %2101 = vmatprep.subr.mxu0 0.0
      %2102 = vmatpush1.msra.mxu0 0.0
      %2103 = vmatprep.subr.mxu0 0.0
      %2104 = vmatpush1.msra.mxu0 0.0
      %2105 = vmatprep.subr.mxu0 0.0
      %2106 = vmatpush1.msra.mxu0 %v1984
      %2107 = vmatprep.subr.mxu0 0.0
      %2108 = vmatpush1.msra.mxu0 %v1983
      %2109 = vmatprep.subr.mxu0 0.0
      %2110 = vmatpush1.msra.mxu0 %v1982
      %2111 = vmatprep.subr.mxu0 0.0
      %2112 = vmatpush1.msra.mxu0 %v1981
      %2113 = vmatprep.subr.mxu0 0.0
      %2114 = vmatpush2.msra.mxu0 0.0
      %2115 = vmatprep.subr.mxu0 0.0
      %2116 = vmatpush2.msra.mxu0 0.0
      %2117 = vmatprep.subr.mxu0 0.0
      %2118 = vmatpush2.msra.mxu0 0.0
      %2119 = vmatprep.subr.mxu0 0.0
      %2120 = vmatpush2.msra.mxu0 0.0
      %2121 = vmatprep.subr.mxu0 0.0
      %2122 = vmatpush2.msra.mxu0 0.0
      %2123 = vmatprep.subr.mxu0 0.0
      %2124 = vmatpush2.msra.mxu0 0.0
      %2125 = vmatprep.subr.mxu0 0.0
      %2126 = vmatpush2.msra.mxu0 0.0
      %2127 = vmatprep.subr.mxu0 0.0
      %2128 = vmatpush2.msra.mxu0 0.0
      %2129 = vmatprep.subr.mxu0 0.0
      %2130 = vmatpush2.msra.mxu0 0.0
      %2131 = vmatprep.subr.mxu0 0.0
      %2132 = vmatpush2.msra.mxu0 0.0
      %2133 = vmatprep.subr.mxu0 0.0
      %2134 = vmatpush2.msra.mxu0 0.0
      %2135 = vmatprep.subr.mxu0 0.0
      %2136 = vmatpush2.msra.mxu0 0.0
      %2137 = vmatprep.subr.mxu0 0.0
      %2138 = vmatpush2.msra.mxu0 0.0
      %2139 = vmatprep.subr.mxu0 0.0
      %2140 = vmatpush2.msra.mxu0 0.0
      %2141 = vmatprep.subr.mxu0 0.0
      %2142 = vmatpush2.msra.mxu0 0.0
      %2143 = vmatprep.subr.mxu0 0.0
      %2144 = vmatpush2.msra.mxu0 0.0
      %2145 = vmatprep.mubr.f32.mxu0 0.0
      %2146 = vmatmul.mubr.f32.gmra.mxu0 %v1986
      %v2147 = vpop.f32.mrf.mxu0
      %v2148 = vadd.f32 0.0, %v2147
      %v2149 = vpop.f32.mrf.mxu0
      %2150 = vmatprep.mubr.f32.mxu0 0.0
      %2151 = vmatmul.mubr.f32.gmra.mxu0 %v1989
      %v2152 = vpop.f32.mrf.mxu0
      %v2153 = vadd.f32 0.0, %v2152
      %v2154 = vpop.f32.mrf.mxu0
      %2155 = vmatprep.mubr.f32.mxu0 0.0
      %2156 = vmatmul.mubr.f32.gmra.mxu0 %v1992
      %v2157 = vpop.f32.mrf.mxu0
      %v2158 = vadd.f32 0.0, %v2157
      %v2159 = vpop.f32.mrf.mxu0
      %2160 = vmatprep.mubr.f32.mxu0 0.0
      %2161 = vmatmul.mubr.f32.gmra.mxu0 %v1995
      %v2162 = vpop.f32.mrf.mxu0
      %v2163 = vadd.f32 0.0, %v2162
      %v2164 = vpop.f32.mrf.mxu0
      %2165 = vmatprep.mubr.f32.mxu0 0.0
      %2166 = vmatmul.mubr.f32.gmra.mxu0 %v1998
      %v2167 = vpop.f32.mrf.mxu0
      %v2168 = vadd.f32 0.0, %v2167
      %v2169 = vpop.f32.mrf.mxu0
      %2170 = vmatprep.mubr.f32.mxu0 0.0
      %2171 = vmatmul.mubr.f32.gmra.mxu0 %v2001
      %v2172 = vpop.f32.mrf.mxu0
      %v2173 = vadd.f32 0.0, %v2172
      %v2174 = vpop.f32.mrf.mxu0
      %2175 = vmatprep.mubr.f32.mxu0 0.0
      %2176 = vmatmul.mubr.f32.gmra.mxu0 %v2004
      %v2177 = vpop.f32.mrf.mxu0
      %v2178 = vadd.f32 0.0, %v2177
      %v2179 = vpop.f32.mrf.mxu0
      %2180 = vmatprep.mubr.f32.mxu0 0.0
      %2181 = vmatmul.mubr.f32.gmra.mxu0 %v2007
      %v2182 = vpop.f32.mrf.mxu0
      %v2183 = vadd.f32 0.0, %v2182
      %v2184 = vpop.f32.mrf.mxu0
      %2185 = vmatprep.mubr.f32.mxu0 0.0
      %2186 = vmatmul.mubr.f32.gmra.mxu0 %v2010
      %v2187 = vpop.f32.mrf.mxu0
      %v2188 = vadd.f32 0.0, %v2187
      %v2189 = vpop.f32.mrf.mxu0
      %2190 = vmatprep.mubr.f32.mxu0 0.0
      %2191 = vmatmul.mubr.f32.gmra.mxu0 %v2013
      %v2192 = vpop.f32.mrf.mxu0
      %v2193 = vadd.f32 0.0, %v2192
      %v2194 = vpop.f32.mrf.mxu0
      %2195 = vmatprep.mubr.f32.mxu0 0.0
      %2196 = vmatmul.mubr.f32.gmra.mxu0 %v2016
      %v2197 = vpop.f32.mrf.mxu0
      %v2198 = vadd.f32 0.0, %v2197
      %v2199 = vpop.f32.mrf.mxu0
      %2200 = vmatprep.mubr.f32.mxu0 0.0
      %2201 = vmatmul.mubr.f32.gmra.mxu0 %v2019
      %v2202 = vpop.f32.mrf.mxu0
      %v2203 = vadd.f32 0.0, %v2202
      %v2204 = vpop.f32.mrf.mxu0
      %2205 = vmatprep.mubr.f32.mxu0 0.0
      %2206 = vmatmul.mubr.f32.gmra.mxu0 %v2022
      %v2207 = vpop.f32.mrf.mxu0
      %v2208 = vadd.f32 0.0, %v2207
      %v2209 = vpop.f32.mrf.mxu0
      %2210 = vmatprep.mubr.f32.mxu0 0.0
      %2211 = vmatmul.mubr.f32.gmra.mxu0 %v2025
      %v2212 = vpop.f32.mrf.mxu0
      %v2213 = vadd.f32 0.0, %v2212
      %v2214 = vpop.f32.mrf.mxu0
      %2215 = vmatprep.mubr.f32.mxu0 0.0
      %2216 = vmatmul.mubr.f32.gmra.mxu0 %v2028
      %v2217 = vpop.f32.mrf.mxu0
      %v2218 = vadd.f32 0.0, %v2217
      %v2219 = vpop.f32.mrf.mxu0
      %2220 = vmatprep.mubr.f32.mxu0 0.0
      %2221 = vmatmul.mubr.f32.gmra.mxu0 %v2031
      %v2222 = vpop.f32.mrf.mxu0
      %v2223 = vadd.f32 0.0, %v2222
      %v2224 = vpop.f32.mrf.mxu0
      %2225 = vmatprep.mubr.f32.mxu0 0.0
      %2226 = vmatmul.mubr.f32.gmra.mxu0 %v2034
      %v2227 = vpop.f32.mrf.mxu0
      %v2228 = vadd.f32 0.0, %v2227
      %v2229 = vpop.f32.mrf.mxu0
      %2230 = vmatprep.mubr.f32.mxu0 0.0
      %2231 = vmatmul.mubr.f32.gmra.mxu0 %v2037
      %v2232 = vpop.f32.mrf.mxu0
      %v2233 = vadd.f32 0.0, %v2232
      %v2234 = vpop.f32.mrf.mxu0
      %2235 = vmatprep.mubr.f32.mxu0 0.0
      %2236 = vmatmul.mubr.f32.gmra.mxu0 %v2040
      %v2237 = vpop.f32.mrf.mxu0
      %v2238 = vadd.f32 0.0, %v2237
      %v2239 = vpop.f32.mrf.mxu0
      %2240 = vmatprep.mubr.f32.mxu0 0.0
      %2241 = vmatmul.mubr.f32.gmra.mxu0 %v2043
      %v2242 = vpop.f32.mrf.mxu0
      %v2243 = vadd.f32 0.0, %v2242
      %v2244 = vpop.f32.mrf.mxu0
      %2245 = vmatprep.mubr.f32.mxu0 0.0
      %2246 = vmatmul.mubr.f32.gmra.mxu0 %v2046
      %v2247 = vpop.f32.mrf.mxu0
      %v2248 = vadd.f32 0.0, %v2247
      %v2249 = vpop.f32.mrf.mxu0
      %2250 = vmatprep.mubr.f32.mxu0 0.0
      %2251 = vmatmul.mubr.f32.gmra.mxu0 %v2049
      %v2252 = vpop.f32.mrf.mxu0
      %v2253 = vadd.f32 0.0, %v2252
      %v2254 = vpop.f32.mrf.mxu0
      %2255 = vmatprep.mubr.f32.mxu0 0.0
      %2256 = vmatmul.mubr.f32.gmra.mxu0 %v2052
      %v2257 = vpop.f32.mrf.mxu0
      %v2258 = vadd.f32 0.0, %v2257
      %v2259 = vpop.f32.mrf.mxu0
      %2260 = vmatprep.mubr.f32.mxu0 0.0
      %2261 = vmatmul.mubr.f32.gmra.mxu0 %v2055
      %v2262 = vpop.f32.mrf.mxu0
      %v2263 = vadd.f32 0.0, %v2262
      %v2264 = vpop.f32.mrf.mxu0
      %2265 = vmatprep.mubr.f32.mxu0 0.0
      %2266 = vmatmul.mubr.f32.gmra.mxu0 %v2058
      %v2267 = vpop.f32.mrf.mxu0
      %v2268 = vadd.f32 0.0, %v2267
      %v2269 = vpop.f32.mrf.mxu0
      %2270 = vmatprep.mubr.f32.mxu0 0.0
      %2271 = vmatmul.mubr.f32.gmra.mxu0 %v2061
      %v2272 = vpop.f32.mrf.mxu0
      %v2273 = vadd.f32 0.0, %v2272
      %v2274 = vpop.f32.mrf.mxu0
      %2275 = vmatprep.mubr.f32.mxu0 0.0
      %2276 = vmatmul.mubr.f32.gmra.mxu0 %v2064
      %v2277 = vpop.f32.mrf.mxu0
      %v2278 = vadd.f32 0.0, %v2277
      %v2279 = vpop.f32.mrf.mxu0
      %2280 = vmatprep.mubr.f32.mxu0 0.0
      %2281 = vmatmul.mubr.f32.gmra.mxu0 %v2067
      %v2282 = vpop.f32.mrf.mxu0
      %v2283 = vadd.f32 0.0, %v2282
      %v2284 = vpop.f32.mrf.mxu0
      %2285 = vmatprep.mubr.f32.mxu0 0.0
      %2286 = vmatmul.mubr.f32.gmra.mxu0 %v2070
      %v2287 = vpop.f32.mrf.mxu0
      %v2288 = vadd.f32 0.0, %v2287
      %v2289 = vpop.f32.mrf.mxu0
      %2290 = vmatprep.mubr.f32.mxu0 0.0
      %2291 = vmatmul.mubr.f32.gmra.mxu0 %v2073
      %v2292 = vpop.f32.mrf.mxu0
      %v2293 = vadd.f32 0.0, %v2292
      %v2294 = vpop.f32.mrf.mxu0
      %2295 = vmatprep.mubr.f32.mxu0 0.0
      %2296 = vmatmul.mubr.f32.gmra.mxu0 %v2076
      %v2297 = vpop.f32.mrf.mxu0
      %v2298 = vadd.f32 0.0, %v2297
      %v2299 = vpop.f32.mrf.mxu0
      %2300 = vmatprep.mubr.f32.mxu0 0.0
      %2301 = vmatmul.mubr.f32.gmra.mxu0 %v2079
      %v2302 = vpop.f32.mrf.mxu0
      %v2303 = vadd.f32 0.0, %v2302
      %v2304 = vpop.f32.mrf.mxu0
      %2305 = vdwg.mxu0
      %v2306 = vld [vmem:[%s8] sm:$0x1]
      %v2308 = vlaneseq
      %v2309 = vshrl.u32 %v2308, 7
      %v2310 = vsub.s32 0, %v2309
      %v2311 = vrot.slane %v2306, %v2310
      %v2313 = vmul.f32 %v2148, %v2311
      %v2314 = vmul.f32 %v2153, %v2311
      %v2315 = vmul.f32 %v2158, %v2311
      %v2316 = vmul.f32 %v2163, %v2311
      %v2317 = vmul.f32 %v2168, %v2311
      %v2318 = vmul.f32 %v2173, %v2311
      %v2319 = vmul.f32 %v2178, %v2311
      %v2320 = vmul.f32 %v2183, %v2311
      %v2321 = vmul.f32 %v2188, %v2311
      %v2322 = vmul.f32 %v2193, %v2311
      %v2323 = vmul.f32 %v2198, %v2311
      %v2324 = vmul.f32 %v2203, %v2311
      %v2325 = vmul.f32 %v2208, %v2311
      %v2326 = vmul.f32 %v2213, %v2311
      %v2327 = vmul.f32 %v2218, %v2311
      %v2328 = vmul.f32 %v2223, %v2311
      %v2329 = vmul.f32 %v2228, %v2311
      %v2330 = vmul.f32 %v2233, %v2311
      %v2331 = vmul.f32 %v2238, %v2311
      %v2332 = vmul.f32 %v2243, %v2311
      %v2333 = vmul.f32 %v2248, %v2311
      %v2334 = vmul.f32 %v2253, %v2311
      %v2335 = vmul.f32 %v2258, %v2311
      %v2336 = vmul.f32 %v2263, %v2311
      %v2337 = vmul.f32 %v2268, %v2311
      %v2338 = vmul.f32 %v2273, %v2311
      %v2339 = vmul.f32 %v2278, %v2311
      %v2340 = vmul.f32 %v2283, %v2311
      %v2341 = vmul.f32 %v2288, %v2311
      %v2342 = vmul.f32 %v2293, %v2311
      %v2343 = vmul.f32 %v2298, %v2311
      %v2344 = vmul.f32 %v2303, %v2311
      %v2345 = vld [vmem:[%s9] sm:$0x1]
      %v2347 = vlaneseq
      %v2348 = vshrl.u32 %v2347, 7
      %v2349 = vsub.s32 0, %v2348
      %v2350 = vrot.slane %v2345, %v2349
      %v2352 = vadd.f32 %v2313, %v2350
      %v2353 = vadd.f32 %v2314, %v2350
      %v2354 = vadd.f32 %v2315, %v2350
      %v2355 = vadd.f32 %v2316, %v2350
      %v2356 = vadd.f32 %v2317, %v2350
      %v2357 = vadd.f32 %v2318, %v2350
      %v2358 = vadd.f32 %v2319, %v2350
      %v2359 = vadd.f32 %v2320, %v2350
      %v2360 = vadd.f32 %v2321, %v2350
      %v2361 = vadd.f32 %v2322, %v2350
      %v2362 = vadd.f32 %v2323, %v2350
      %v2363 = vadd.f32 %v2324, %v2350
      %v2364 = vadd.f32 %v2325, %v2350
      %v2365 = vadd.f32 %v2326, %v2350
      %v2366 = vadd.f32 %v2327, %v2350
      %v2367 = vadd.f32 %v2328, %v2350
      %v2368 = vadd.f32 %v2329, %v2350
      %v2369 = vadd.f32 %v2330, %v2350
      %v2370 = vadd.f32 %v2331, %v2350
      %v2371 = vadd.f32 %v2332, %v2350
      %v2372 = vadd.f32 %v2333, %v2350
      %v2373 = vadd.f32 %v2334, %v2350
      %v2374 = vadd.f32 %v2335, %v2350
      %v2375 = vadd.f32 %v2336, %v2350
      %v2376 = vadd.f32 %v2337, %v2350
      %v2377 = vadd.f32 %v2338, %v2350
      %v2378 = vadd.f32 %v2339, %v2350
      %v2379 = vadd.f32 %v2340, %v2350
      %v2380 = vadd.f32 %v2341, %v2350
      %v2381 = vadd.f32 %v2342, %v2350
      %v2382 = vadd.f32 %v2343, %v2350
      %v2383 = vadd.f32 %v2344, %v2350
      %v2384 = vadd.f32 %v2352, %v406
      %v2385 = vadd.f32 %v2353, %v407
      %v2386 = vadd.f32 %v2354, %v408
      %v2387 = vadd.f32 %v2355, %v409
      %v2388 = vadd.f32 %v2356, %v410
      %v2389 = vadd.f32 %v2357, %v411
      %v2390 = vadd.f32 %v2358, %v412
      %v2391 = vadd.f32 %v2359, %v413
      %v2392 = vadd.f32 %v2360, %v414
      %v2393 = vadd.f32 %v2361, %v415
      %v2394 = vadd.f32 %v2362, %v416
      %v2395 = vadd.f32 %v2363, %v417
      %v2396 = vadd.f32 %v2364, %v418
      %v2397 = vadd.f32 %v2365, %v419
      %v2398 = vadd.f32 %v2366, %v420
      %v2399 = vadd.f32 %v2367, %v421
      %v2400 = vadd.f32 %v2368, %v422
      %v2401 = vadd.f32 %v2369, %v423
      %v2402 = vadd.f32 %v2370, %v424
      %v2403 = vadd.f32 %v2371, %v425
      %v2404 = vadd.f32 %v2372, %v426
      %v2405 = vadd.f32 %v2373, %v427
      %v2406 = vadd.f32 %v2374, %v428
      %v2407 = vadd.f32 %v2375, %v429
      %v2408 = vadd.f32 %v2376, %v430
      %v2409 = vadd.f32 %v2377, %v431
      %v2410 = vadd.f32 %v2378, %v432
      %v2411 = vadd.f32 %v2379, %v433
      %v2412 = vadd.f32 %v2380, %v434
      %v2413 = vadd.f32 %v2381, %v435
      %v2414 = vadd.f32 %v2382, %v436
      %v2415 = vadd.f32 %v2383, %v437
      %2416 = vst.msk [vmem:[%s359] sm:$0xff] %vm439, %v2384
      %2417 = vst.msk [vmem:[%s359 + $0x8] sm:$0xff] %vm439, %v2385
      %2418 = vst.msk [vmem:[%s359 + $0x10] sm:$0xff] %vm439, %v2386
      %2419 = vst.msk [vmem:[%s359 + $0x18] sm:$0xff] %vm439, %v2387
      %2420 = vst.msk [vmem:[%s359 + $0x20] sm:$0xff] %vm439, %v2388
      %2421 = vst.msk [vmem:[%s359 + $0x28] sm:$0xff] %vm439, %v2389
      %2422 = vst.msk [vmem:[%s359 + $0x30] sm:$0xff] %vm439, %v2390
      %2423 = vst.msk [vmem:[%s359 + $0x38] sm:$0xff] %vm439, %v2391
      %2424 = vst.msk [vmem:[%s359 + $0x40] sm:$0xff] %vm439, %v2392
      %2425 = vst.msk [vmem:[%s359 + $0x48] sm:$0xff] %vm439, %v2393
      %2426 = vst.msk [vmem:[%s359 + $0x50] sm:$0xff] %vm439, %v2394
      %2427 = vst.msk [vmem:[%s359 + $0x58] sm:$0xff] %vm439, %v2395
      %2428 = vst.msk [vmem:[%s359 + $0x60] sm:$0xff] %vm439, %v2396
      %2429 = vst.msk [vmem:[%s359 + $0x68] sm:$0xff] %vm439, %v2397
      %2430 = vst.msk [vmem:[%s359 + $0x70] sm:$0xff] %vm439, %v2398
      %2431 = vst.msk [vmem:[%s359 + $0x78] sm:$0xff] %vm439, %v2399
      %2432 = vst.msk [vmem:[%s359 + $0x80] sm:$0xff] %vm439, %v2400
      %2433 = vst.msk [vmem:[%s359 + $0x88] sm:$0xff] %vm439, %v2401
      %2434 = vst.msk [vmem:[%s359 + $0x90] sm:$0xff] %vm439, %v2402
      %2435 = vst.msk [vmem:[%s359 + $0x98] sm:$0xff] %vm439, %v2403
      %2436 = vst.msk [vmem:[%s359 + $0xa0] sm:$0xff] %vm439, %v2404
      %2437 = vst.msk [vmem:[%s359 + $0xa8] sm:$0xff] %vm439, %v2405
      %2438 = vst.msk [vmem:[%s359 + $0xb0] sm:$0xff] %vm439, %v2406
      %2439 = vst.msk [vmem:[%s359 + $0xb8] sm:$0xff] %vm439, %v2407
      %2440 = vst.msk [vmem:[%s359 + $0xc0] sm:$0xff] %vm439, %v2408
      %2441 = vst.msk [vmem:[%s359 + $0xc8] sm:$0xff] %vm439, %v2409
      %2442 = vst.msk [vmem:[%s359 + $0xd0] sm:$0xff] %vm439, %v2410
      %2443 = vst.msk [vmem:[%s359 + $0xd8] sm:$0xff] %vm439, %v2411
      %2444 = vst.msk [vmem:[%s359 + $0xe0] sm:$0xff] %vm439, %v2412
      %2445 = vst.msk [vmem:[%s359 + $0xe8] sm:$0xff] %vm439, %v2413
      %2446 = vst.msk [vmem:[%s359 + $0xf0] sm:$0xff] %vm439, %v2414
      %2447 = vst.msk [vmem:[%s359 + $0xf8] sm:$0xff] %vm439, %v2415
      %p2448 = scmp.lt.s32.totalorder %s21, 1
      %s2449 = scalar_select %p2448, %s21, 1
      %s2450 = smul.addr %s2449, 32
      %s2451 = smul.addr %s2450, 8
      %s2452 = scalar_lea.vmem %s10, %s2451
      // Predicated region
      $region61: #{inverted_residual_forward.1} parent=59 // pred_check
        %p2453 = pneg %p254
      $region62: #{inverted_residual_forward.1} parent=59 // pred_check_branch
        %2455 = sbr.rel (%p2453) target = $region64
      $region63: #{inverted_residual_forward.1} parent=59 // pred_region
        _
      $region64: #{inverted_residual_forward.1} parent=59 // pred_fallthru
        _
    $region60: #{inverted_residual_forward.1} parent=5 // pred_fallthru
      _
    %p2456 = scmp.le.s32.totalorder 2, %s16
    // Predicated region
    $region65: #{inverted_residual_forward.1} parent=5 // pred_check
      %p2457 = pneg %p2456
    $region66: #{inverted_residual_forward.1} parent=5 // pred_check_branch
      %2459 = sbr.rel (%p2457) target = $region68
    $region67: #{inverted_residual_forward.1} parent=5 // pred_region
      %s2460 = ssub.s32 %s16, 2
      // Predicated region
      $region69: #{inverted_residual_forward.1} parent=67 // pred_check
        %p2461 = pneg %p260
      $region70: #{inverted_residual_forward.1} parent=67 // pred_check_branch
        %2463 = sbr.rel (%p2461) target = $region72
      $region71: #{inverted_residual_forward.1} parent=67 // pred_region
        %p2464 = scmp.lt.s32.totalorder %s22, 1
        %s2465 = scalar_select %p2464, %s22, 1
        %s2466 = smul.addr %s2465, 32
        %s2467 = smul.addr %s2466, 8
        %s2468 = scalar_lea.vmem %s10, %s2467
      $region72: #{inverted_residual_forward.1} parent=67 // pred_fallthru
        _
    $region68: #{inverted_residual_forward.1} parent=5 // pred_fallthru
      _
  $region6: #{inverted_residual_forward.1} parent=0 // loop_footer
    %s20 = sadd.s32 1, %s16
  $region7: #{inverted_residual_forward.1} parent=0 // loop_footer_branch
    %15 = sbr.rel target = $region3
  $region8: #{inverted_residual_forward.1} parent=0 // loop_exit
    _

</llo_original>
